<compile_context>
chip_gen: v5e
topology: v5e:2x2
jax: 0.10.0
libtpu: 0.0.40
codegen_flags: <defaults>
</compile_context>

<pallas_src>
import jax
import jax.numpy as jnp
from jax.experimental import pallas as pl
from jax.experimental.pallas import tpu as pltpu

# Vocabulary layout of the 7 stacked embedding tables.
_VOCABS = (2, 2, 2, 11, 34, 19, 31)      # gender, korean, primary, job, rep, place, add
_OFF_P = (0, 2, 4, 6, 17)                # row offsets of the 5 cat_p vocabs
_OFF_C = (51, 70)                        # row offsets of the 2 cat_c vocabs
_VOCAB_PAD = 128                         # total 101 -> pad to 128 lanes
_OUT_PAD = 128                           # lane-dense padded output width
_SENTINEL = -(1 << 20)                   # id that can never match any (lane - offset)


def _mlp_regressor_kernel(
    cont_p_ref, cont_c_ref, cat_p_ref, cat_c_ref, vlen_ref,
    pw1_ref, pb1_ref, cw1_ref, cb1_ref,
    wcat_ref, wp_ref, wc_ref, b0f_ref,
    w1_ref, b1_ref, w2_ref, b2_ref,
    out_ref,
    count_acc, hp_acc, hc_acc,
):
    ti = pl.program_id(1)
    nts = pl.num_programs(1)
    TB, TS, _ = cont_p_ref.shape
    E = pw1_ref.shape[1]                                 # 32

    @pl.when(ti == 0)
    def _():
        count_acc[...] = jnp.zeros_like(count_acc)
        hp_acc[...] = jnp.zeros_like(hp_acc)
        hc_acc[...] = jnp.zeros_like(hc_acc)

    # Per-token validity for this token tile (t < val_len).
    vlen = vlen_ref[...]                                 # (TB, 1) int32
    tok = jax.lax.broadcasted_iota(jnp.int32, (1, TS, 1), 1) + ti * TS
    valid = tok < vlen.reshape(TB, 1, 1)                 # (TB, TS, 1) bool

    # ---- categorical path: masked multi-hot COUNT accumulation -------------
    # Invalid tokens get a sentinel id that can never match; the 7 vocab ranges
    # are disjoint in the stacked table, so the one-hots combine with OR and
    # there is a single bool->f32 convert per step.
    cp = jnp.where(valid, cat_p_ref[...].astype(jnp.int32), _SENTINEL)   # (TB,TS,5)
    cc = jnp.where(valid, cat_c_ref[...].astype(jnp.int32), _SENTINEL)   # (TB,TS,2)
    lane = jax.lax.broadcasted_iota(jnp.int32, (1, 1, _VOCAB_PAD), 2)
    hot = cp[:, :, 0:1] == (lane - _OFF_P[0])
    for f in range(1, 5):
        hot = jnp.logical_or(hot, cp[:, :, f:f + 1] == (lane - _OFF_P[f]))
    hot = jnp.logical_or(hot, cc[:, :, 0:1] == (lane - _OFF_C[0]))
    hot = jnp.logical_or(hot, cc[:, :, 1:2] == (lane - _OFF_C[1]))
    count_acc[...] += jnp.sum(hot.astype(jnp.float32), axis=1)           # (TB, 128)

    # ---- continuous path: only the tiny first layer runs per token ---------
    # (second linear layer is hoisted to finalize via linearity of the mean)
    maskf = valid.astype(jnp.float32)                    # (TB, TS, 1)
    hp = jnp.maximum(
        jnp.dot(cont_p_ref[...].reshape(TB * TS, 3), pw1_ref[...],
                preferred_element_type=jnp.float32) + pb1_ref[...], 0.0)
    hc = jnp.maximum(
        jnp.dot(cont_c_ref[...].reshape(TB * TS, 2), cw1_ref[...],
                preferred_element_type=jnp.float32) + cb1_ref[...], 0.0)
    hp_acc[...] += jnp.sum(hp.reshape(TB, TS, E) * maskf, axis=1)        # (TB, 32)
    hc_acc[...] += jnp.sum(hc.reshape(TB, TS, E) * maskf, axis=1)        # (TB, 32)

    # ---- finalize: pooled mean -> pre-folded head MLP, lane-dense store ----
    @pl.when(ti == nts - 1)
    def _():
        vl = jnp.maximum(vlen, 1).astype(jnp.float32)    # guard val_len == 0
        inv = pl.reciprocal(vl, approx=True)             # (TB, 1) on the EUP
        z = jnp.dot(count_acc[...] * inv, wcat_ref[...],
                    preferred_element_type=jnp.float32)
        z += jnp.dot(hp_acc[...] * inv, wp_ref[...],
                     preferred_element_type=jnp.float32)
        z += jnp.dot(hc_acc[...] * inv, wc_ref[...],
                     preferred_element_type=jnp.float32)
        h0 = jnp.maximum(z + b0f_ref[...], 0.0)
        h1 = jnp.maximum(
            jnp.dot(h0, w1_ref[...], preferred_element_type=jnp.float32)
            + b1_ref[...], 0.0)
        out_ref[...] = (jnp.dot(h1, w2_ref[...], preferred_element_type=jnp.float32)
                        + b2_ref[...])


def _fuse_params(params):
    """Build the fused / pre-folded weights consumed by the kernel (host-side)."""
    (pw1, pb1, pw2, pb2, cw1, cb1, cw2, cb2,
     t_gender, t_korean, t_primary, t_job, t_rep, t_place, t_add,
     w0, b0, w1, b1, w2, b2) = params
    E = pw1.shape[1]                  # 32
    E2 = 2 * E                        # 64

    # Stacked embedding table (mean scales baked in): cat_p vocabs -> cols 0:32,
    # cat_c vocabs -> cols 32:64; row layout matches _OFF_P / _OFF_C.
    p_stack = jnp.concatenate([t_gender, t_korean, t_primary, t_job, t_rep], 0) / 5.0
    c_stack = jnp.concatenate([t_place, t_add], 0) / 2.0
    n_p, n_c = p_stack.shape[0], c_stack.shape[0]
    table = jnp.zeros((_VOCAB_PAD, E2), jnp.float32)
    table = table.at[:n_p, :E].set(p_stack)
    table = table.at[n_p:n_p + n_c, E:].set(c_stack)

    # Pre-fold the pooled features through head layer 0:
    #   x @ w0 = count_mean @ (table @ w0[:64])
    #          + hp_mean @ (pw2 @ w0[64:96]) + hc_mean @ (cw2 @ w0[96:128])
    #          + pb2 @ w0[64:96] + cb2 @ w0[96:128]
    w0_cat, w0_p, w0_c = w0[:E2, :], w0[E2:E2 + E, :], w0[E2 + E:, :]
    wcat = table @ w0_cat                                # (128, 64)
    wp = pw2 @ w0_p                                      # (32, 64)
    wc = cw2 @ w0_c                                      # (32, 64)
    b0f = b0 + pb2 @ w0_p + cb2 @ w0_c                   # (1, 64)

    # Lane-dense padded output layer (sliced back in the wrapper).
    out_size = w2.shape[1]
    w2p = jnp.zeros((w2.shape[0], _OUT_PAD), jnp.float32).at[:, :out_size].set(w2)
    b2p = jnp.zeros((1, _OUT_PAD), jnp.float32).at[:, :out_size].set(b2)

    return (pw1, pb1, cw1, cb1, wcat, wp, wc, b0f, w1, b1, w2p, b2p), out_size


def _round_up(x, m):
    return ((x + m - 1) // m) * m


def mlp_regressor_forward(params, cont_p, cont_c, cat_p, cat_c, val_len, diff_days,
                          *, tb=8, ts=512, vmem_limit_bytes=48 * 1024 * 1024):
    """Pallas forward matching MLPRegressor.forward(cont_p, cont_c, cat_p, cat_c, len, diff_days).

    tb: batch tile (multiple of 8).  ts: token tile (multiple of 8).  The
    defaults target v5e/v6e/v7x: ts>=256 fills the MXU/VPU per step, tb=8 keeps
    >=2 batch tiles (both v7x TensorCores busy) for B>=16, and the per-step VMEM
    footprint (~tb*ts*4 KiB of double-buffered input slabs plus temporaries)
    stays under the explicit vmem_limit_bytes on every generation.  Tiles are
    clamped to the (8-rounded) input sizes for small test shapes.  Callers may
    pass categorical ids as int8 to cut DMA traffic; the kernel widens in-VMEM.
    """
    del diff_days  # unused: reduction='mean' and disable_pe=True
    B, S, _ = cont_p.shape
    fused, out_size = _fuse_params(params)
    (pw1, pb1, cw1, cb1, wcat, wp, wc, b0f, w1, b1, w2p, b2p) = fused
    E = pw1.shape[1]

    tb = _round_up(max(1, min(tb, _round_up(B, 8))), 8)
    ts = _round_up(max(1, min(ts, _round_up(S, 8))), 8)
    b_pad = _round_up(B, tb)
    s_pad = _round_up(S, ts)

    cont_p = cont_p.astype(jnp.float32)
    cont_c = cont_c.astype(jnp.float32)
    # No slab repacking: inputs go straight to the kernel.  Pad with zeros only
    # when the shapes aren't tile-aligned (no-op for aligned production shapes);
    # padded tokens/rows are masked out in-kernel via val_len.
    if b_pad != B or s_pad != S:
        padcfg = ((0, b_pad - B), (0, s_pad - S), (0, 0))
        cont_p = jnp.pad(cont_p, padcfg)
        cont_c = jnp.pad(cont_c, padcfg)
        cat_p = jnp.pad(cat_p, padcfg)
        cat_c = jnp.pad(cat_c, padcfg)

    vlen = jnp.zeros((b_pad, 1), jnp.int32)
    vlen = vlen.at[:B, 0].set(val_len.astype(jnp.int32).reshape(B))

    grid = (b_pad // tb, s_pad // ts)
    const = lambda bi, ti: (0, 0)
    data = lambda bi, ti: (bi, ti, 0)

    in_specs = [
        pl.BlockSpec((tb, ts, 3), data),                   # cont_p
        pl.BlockSpec((tb, ts, 2), data),                   # cont_c
        pl.BlockSpec((tb, ts, 5), data),                   # cat_p
        pl.BlockSpec((tb, ts, 2), data),                   # cat_c
        pl.BlockSpec((tb, 1), lambda bi, ti: (bi, 0)),     # val_len
        pl.BlockSpec((3, E), const),                       # pw1
        pl.BlockSpec((1, E), const),                       # pb1
        pl.BlockSpec((2, E), const),                       # cw1
        pl.BlockSpec((1, E), const),                       # cb1
        pl.BlockSpec((_VOCAB_PAD, 2 * E), const),          # wcat = table @ w0[:64]
        pl.BlockSpec((E, 2 * E), const),                   # wp   = pw2 @ w0[64:96]
        pl.BlockSpec((E, 2 * E), const),                   # wc   = cw2 @ w0[96:128]
        pl.BlockSpec((1, 2 * E), const),                   # b0f (folded bias)
        pl.BlockSpec((2 * E, 2 * E), const),               # w1
        pl.BlockSpec((1, 2 * E), const),                   # b1
        pl.BlockSpec((2 * E, _OUT_PAD), const),            # w2 (lane-padded)
        pl.BlockSpec((1, _OUT_PAD), const),                # b2 (lane-padded)
    ]
    out_specs = pl.BlockSpec((tb, _OUT_PAD), lambda bi, ti: (bi, 0))

    out = pl.pallas_call(
        _mlp_regressor_kernel,
        out_shape=jax.ShapeDtypeStruct((b_pad, _OUT_PAD), jnp.float32),
        grid_spec=pltpu.PrefetchScalarGridSpec(
            num_scalar_prefetch=0,
            grid=grid,
            in_specs=in_specs,
            out_specs=out_specs,
            scratch_shapes=[
                pltpu.VMEM((tb, _VOCAB_PAD), jnp.float32),   # multi-hot counts
                pltpu.VMEM((tb, E), jnp.float32),            # sum relu(cont_p@pw1+pb1)
                pltpu.VMEM((tb, E), jnp.float32),            # sum relu(cont_c@cw1+cb1)
            ],
        ),
        compiler_params=pltpu.CompilerParams(
            dimension_semantics=("parallel", "arbitrary"),
            vmem_limit_bytes=vmem_limit_bytes),
    )(cont_p, cont_c, cat_p, cat_c, vlen,
      pw1, pb1, cw1, cb1, wcat, wp, wc, b0f, w1, b1, w2p, b2p)

    return out[:B, :out_size]


def init_params(key, output_size=128, hidden_size=64, out_size=2):
    """Deterministic synthetic parameters with the shapes implied by __init__."""
    E = output_size // 4  # 32

    def linear(k, fin, fout):
        kw, kb = jax.random.split(k)
        bound = 1.0 / (fin ** 0.5)
        w = jax.random.uniform(kw, (fin, fout), jnp.float32, -bound, bound)
        b = jax.random.uniform(kb, (1, fout), jnp.float32, -bound, bound)
        return w, b

    def embedding(k, vocab, dim):
        return jax.random.normal(k, (vocab, dim), jnp.float32)

    ks = jax.random.split(key, 14)
    pw1, pb1 = linear(ks[0], 3, E)
    pw2, pb2 = linear(ks[1], E, E)
    cw1, cb1 = linear(ks[2], 2, E)
    cw2, cb2 = linear(ks[3], E, E)
    t_gender = embedding(ks[4], 2, E)
    t_korean = embedding(ks[5], 2, E)
    t_primary = embedding(ks[6], 2, E)
    t_job = embedding(ks[7], 11, E)
    t_rep = embedding(ks[8], 34, E)
    t_place = embedding(ks[9], 19, E)
    t_add = embedding(ks[10], 31, E)
    w0, b0 = linear(ks[11], output_size, hidden_size)
    w1, b1 = linear(ks[12], hidden_size, hidden_size)
    w2, b2 = linear(ks[13], hidden_size, out_size)

    return (pw1, pb1, pw2, pb2,
            cw1, cb1, cw2, cb2,
            t_gender, t_korean, t_primary, t_job, t_rep, t_place, t_add,
            w0, b0, w1, b1, w2, b2)


def _reference_forward(params, cont_p, cont_c, cat_p, cat_c, val_len, diff_days):
    """Pure-JAX reference mirroring the PyTorch module (for a sanity check)."""
    del diff_days
    (pw1, pb1, pw2, pb2, cw1, cb1, cw2, cb2,
     tg, tk, tp, tj, tr, tpl, ta, w0, b0, w1, b1, w2, b2) = params
    cont_p_emb = jnp.maximum(cont_p @ pw1 + pb1, 0.0) @ pw2 + pb2
    cont_c_emb = jnp.maximum(cont_c @ cw1 + cb1, 0.0) @ cw2 + cb2
    a = [tg[cat_p[..., 0]], tk[cat_p[..., 1]], tp[cat_p[..., 2]],
         tj[cat_p[..., 3]], tr[cat_p[..., 4]]]
    c = [tpl[cat_c[..., 0]], ta[cat_c[..., 1]]]
    cat_p_emb = sum(a) / 5.0
    cat_c_emb = sum(c) / 2.0
    x = jnp.concatenate([cat_p_emb, cat_c_emb, cont_p_emb, cont_c_emb], axis=-1)
    B, S, _ = x.shape
    mask = (jnp.arange(S)[None, :] < val_len[:, None]).astype(jnp.float32)
    pooled = (x * mask[:, :, None]).sum(1) / val_len[:, None].astype(jnp.float32)
    h = jnp.maximum(pooled @ w0 + b0, 0.0)
    h = jnp.maximum(h @ w1 + b1, 0.0)
    return h @ w2 + b2


if __name__ == "__main__":
    key = jax.random.PRNGKey(0)
    k_params, k_data = jax.random.split(key)
    params = init_params(k_params)

    B, S = 2, 8
    ks = jax.random.split(k_data, 5)
    cont_p = jax.random.normal(ks[0], (B, S, 3), jnp.float32)
    cont_c = jax.random.normal(ks[1], (B, S, 2), jnp.float32)
    vocab_p = [2, 2, 2, 11, 34]
    cat_p = jnp.stack(
        [jax.random.randint(jax.random.fold_in(ks[2], i), (B, S), 0, v)
         for i, v in enumerate(vocab_p)], axis=-1).astype(jnp.int32)
    vocab_c = [19, 31]
    cat_c = jnp.stack(
        [jax.random.randint(jax.random.fold_in(ks[3], i), (B, S), 0, v)
         for i, v in enumerate(vocab_c)], axis=-1).astype(jnp.int32)
    val_len = jnp.array([5, 8], dtype=jnp.int32)
    diff_days = jax.random.randint(ks[4], (B, S, 1), 0, 5).astype(jnp.float32)

    out = mlp_regressor_forward(params, cont_p, cont_c, cat_p, cat_c, val_len, diff_days)
    out = jax.block_until_ready(out)
    assert out.shape == (B, 2) and out.dtype == jnp.float32

    ref = _reference_forward(params, cont_p, cont_c, cat_p, cat_c, val_len, diff_days)
    ref = jax.block_until_ready(ref)
    assert jnp.allclose(out, ref, rtol=1e-2, atol=1e-2), (out, ref)

    print("KERNEL_OK")
</pallas_src>

<mosaic_0001>
module attributes {stable_mosaic.version = 11 : i64} {
  func.func @_mlp_regressor_kernel(%arg0: i32, %arg1: i32, %arg2: memref<8x8x3xf32, #tpu.memory_space<vmem>>, %arg3: memref<8x8x2xf32, #tpu.memory_space<vmem>>, %arg4: memref<8x8x5xi32, #tpu.memory_space<vmem>>, %arg5: memref<8x8x2xi32, #tpu.memory_space<vmem>>, %arg6: memref<8x1xi32, #tpu.memory_space<vmem>>, %arg7: memref<3x32xf32, #tpu.memory_space<vmem>>, %arg8: memref<1x32xf32, #tpu.memory_space<vmem>>, %arg9: memref<2x32xf32, #tpu.memory_space<vmem>>, %arg10: memref<1x32xf32, #tpu.memory_space<vmem>>, %arg11: memref<128x64xf32, #tpu.memory_space<vmem>>, %arg12: memref<32x64xf32, #tpu.memory_space<vmem>>, %arg13: memref<32x64xf32, #tpu.memory_space<vmem>>, %arg14: memref<1x64xf32, #tpu.memory_space<vmem>>, %arg15: memref<64x64xf32, #tpu.memory_space<vmem>>, %arg16: memref<1x64xf32, #tpu.memory_space<vmem>>, %arg17: memref<64x128xf32, #tpu.memory_space<vmem>>, %arg18: memref<1x128xf32, #tpu.memory_space<vmem>>, %arg19: memref<8x128xf32, #tpu.memory_space<vmem>>, %arg20: memref<8x128xf32, #tpu.memory_space<vmem>>, %arg21: memref<8x32xf32, #tpu.memory_space<vmem>>, %arg22: memref<8x32xf32, #tpu.memory_space<vmem>>) attributes {dimension_semantics = [#tpu.dimension_semantics<parallel>, #tpu.dimension_semantics<arbitrary>], iteration_bounds = array<i64: 1, 1>, scalar_prefetch = 0 : i64, scratch_operands = 3 : i64, tpu.core_type = #tpu.core_type<tc>, window_params = [{transform_indices = @transform_0, window_bounds = array<i64: 8, 8, 3>}, {transform_indices = @transform_1, window_bounds = array<i64: 8, 8, 2>}, {transform_indices = @transform_2, window_bounds = array<i64: 8, 8, 5>}, {transform_indices = @transform_3, window_bounds = array<i64: 8, 8, 2>}, {transform_indices = @transform_4, window_bounds = array<i64: 8, 1>}, {pipeline_mode = #tpu.pipeline_mode<synchronous>, transform_indices = @transform_5, window_bounds = array<i64: 3, 32>}, {pipeline_mode = #tpu.pipeline_mode<synchronous>, transform_indices = @transform_6, window_bounds = array<i64: 1, 32>}, {pipeline_mode = #tpu.pipeline_mode<synchronous>, transform_indices = @transform_7, window_bounds = array<i64: 2, 32>}, {pipeline_mode = #tpu.pipeline_mode<synchronous>, transform_indices = @transform_8, window_bounds = array<i64: 1, 32>}, {pipeline_mode = #tpu.pipeline_mode<synchronous>, transform_indices = @transform_9, window_bounds = array<i64: 128, 64>}, {pipeline_mode = #tpu.pipeline_mode<synchronous>, transform_indices = @transform_10, window_bounds = array<i64: 32, 64>}, {pipeline_mode = #tpu.pipeline_mode<synchronous>, transform_indices = @transform_11, window_bounds = array<i64: 32, 64>}, {pipeline_mode = #tpu.pipeline_mode<synchronous>, transform_indices = @transform_12, window_bounds = array<i64: 1, 64>}, {pipeline_mode = #tpu.pipeline_mode<synchronous>, transform_indices = @transform_13, window_bounds = array<i64: 64, 64>}, {pipeline_mode = #tpu.pipeline_mode<synchronous>, transform_indices = @transform_14, window_bounds = array<i64: 1, 64>}, {pipeline_mode = #tpu.pipeline_mode<synchronous>, transform_indices = @transform_15, window_bounds = array<i64: 64, 128>}, {pipeline_mode = #tpu.pipeline_mode<synchronous>, transform_indices = @transform_16, window_bounds = array<i64: 1, 128>}, {transform_indices = @transform_17, window_bounds = array<i64: 8, 128>}]} {
    %c0_i32 = arith.constant 0 : i32
    %0 = arith.cmpi eq, %arg1, %c0_i32 : i32
    %1 = arith.extui %0 : i1 to i32
    %c0_i32_0 = arith.constant 0 : i32
    %2 = arith.cmpi ne, %1, %c0_i32_0 : i32
    scf.if %2 {
      %cst_44 = arith.constant 0.000000e+00 : f32
      %114 = vector.broadcast %cst_44 : f32 to vector<8x128xf32>
      %c0_45 = arith.constant 0 : index
      %c0_46 = arith.constant 0 : index
      %115 = vector.load %arg20[%c0_45, %c0_46] : memref<8x128xf32, #tpu.memory_space<vmem>>, vector<8x128xf32>
      tpu.vector_store %arg20[%c0_45, %c0_46], %114 {strides = array<i32>} : memref<8x128xf32, #tpu.memory_space<vmem>>, vector<8x128xf32>,
      %cst_47 = arith.constant 0.000000e+00 : f32
      %116 = vector.broadcast %cst_47 : f32 to vector<8x32xf32>
      %c0_48 = arith.constant 0 : index
      %c0_49 = arith.constant 0 : index
      %117 = vector.load %arg21[%c0_48, %c0_49] : memref<8x32xf32, #tpu.memory_space<vmem>>, vector<8x32xf32>
      tpu.vector_store %arg21[%c0_48, %c0_49], %116 {strides = array<i32>} : memref<8x32xf32, #tpu.memory_space<vmem>>, vector<8x32xf32>,
      %cst_50 = arith.constant 0.000000e+00 : f32
      %118 = vector.broadcast %cst_50 : f32 to vector<8x32xf32>
      %c0_51 = arith.constant 0 : index
      %c0_52 = arith.constant 0 : index
      %119 = vector.load %arg22[%c0_51, %c0_52] : memref<8x32xf32, #tpu.memory_space<vmem>>, vector<8x32xf32>
      tpu.vector_store %arg22[%c0_51, %c0_52], %118 {strides = array<i32>} : memref<8x32xf32, #tpu.memory_space<vmem>>, vector<8x32xf32>,
    } else {
    }
    %c0 = arith.constant 0 : index
    %c0_1 = arith.constant 0 : index
    %3 = vector.load %arg6[%c0, %c0_1] : memref<8x1xi32, #tpu.memory_space<vmem>>, vector<8x1xi32>
    %4 = tpu.iota {dimensions = array<i32: 1>} : vector<1x8x1xi32>
    %c8_i32 = arith.constant 8 : i32
    %5 = arith.muli %arg1, %c8_i32 : i32
    %6 = vector.broadcast %5 : i32 to vector<1x8x1xi32>
    %7 = arith.addi %4, %6 : vector<1x8x1xi32>
    %8 = vector.shape_cast %3 : vector<8x1xi32> to vector<8x1x1xi32>
    %9 = vector.broadcast %7 : vector<1x8x1xi32> to vector<8x8x1xi32>
    %10 = vector.broadcast %8 : vector<8x1x1xi32> to vector<8x8x1xi32>
    %11 = arith.cmpi slt, %9, %10 : vector<8x8x1xi32>
    %c0_2 = arith.constant 0 : index
    %c0_3 = arith.constant 0 : index
    %c0_4 = arith.constant 0 : index
    %12 = vector.load %arg4[%c0_2, %c0_3, %c0_4] : memref<8x8x5xi32, #tpu.memory_space<vmem>>, vector<8x8x5xi32>
    %c-1048576_i32 = arith.constant -1048576 : i32
    %13 = vector.shape_cast %11 : vector<8x8x1xi1> to vector<8x8x1xi1>
    %14 = vector.broadcast %13 : vector<8x8x1xi1> to vector<8x8x5xi1>
    %15 = vector.broadcast %c-1048576_i32 : i32 to vector<8x8x5xi32>
    %16 = arith.select %14, %12, %15 : vector<8x8x5xi1>, vector<8x8x5xi32>
    %c0_5 = arith.constant 0 : index
    %c0_6 = arith.constant 0 : index
    %c0_7 = arith.constant 0 : index
    %17 = vector.load %arg5[%c0_5, %c0_6, %c0_7] : memref<8x8x2xi32, #tpu.memory_space<vmem>>, vector<8x8x2xi32>
    %c-1048576_i32_8 = arith.constant -1048576 : i32
    %18 = vector.shape_cast %11 : vector<8x8x1xi1> to vector<8x8x1xi1>
    %19 = vector.broadcast %18 : vector<8x8x1xi1> to vector<8x8x2xi1>
    %20 = vector.broadcast %c-1048576_i32_8 : i32 to vector<8x8x2xi32>
    %21 = arith.select %19, %17, %20 : vector<8x8x2xi1>, vector<8x8x2xi32>
    %22 = tpu.iota {dimensions = array<i32: 2>} : vector<1x1x128xi32>
    %23 = vector.extract_strided_slice %16 {offsets = [0, 0, 0], sizes = [8, 8, 1], strides = [1, 1, 1]} : vector<8x8x5xi32> to vector<8x8x1xi32>
    %c0_i32_9 = arith.constant 0 : i32
    %24 = vector.broadcast %c0_i32_9 : i32 to vector<1x1x128xi32>
    %25 = arith.subi %22, %24 : vector<1x1x128xi32>
    %26 = vector.broadcast %23 : vector<8x8x1xi32> to vector<8x8x128xi32>
    %27 = vector.broadcast %25 : vector<1x1x128xi32> to vector<8x8x128xi32>
    %28 = arith.cmpi eq, %26, %27 : vector<8x8x128xi32>
    %29 = vector.extract_strided_slice %16 {offsets = [0, 0, 1], sizes = [8, 8, 1], strides = [1, 1, 1]} : vector<8x8x5xi32> to vector<8x8x1xi32>
    %c2_i32 = arith.constant 2 : i32
    %30 = vector.broadcast %c2_i32 : i32 to vector<1x1x128xi32>
    %31 = arith.subi %22, %30 : vector<1x1x128xi32>
    %32 = vector.broadcast %29 : vector<8x8x1xi32> to vector<8x8x128xi32>
    %33 = vector.broadcast %31 : vector<1x1x128xi32> to vector<8x8x128xi32>
    %34 = arith.cmpi eq, %32, %33 : vector<8x8x128xi32>
    %35 = arith.ori %28, %34 : vector<8x8x128xi1>
    %36 = vector.extract_strided_slice %16 {offsets = [0, 0, 2], sizes = [8, 8, 1], strides = [1, 1, 1]} : vector<8x8x5xi32> to vector<8x8x1xi32>
    %c4_i32 = arith.constant 4 : i32
    %37 = vector.broadcast %c4_i32 : i32 to vector<1x1x128xi32>
    %38 = arith.subi %22, %37 : vector<1x1x128xi32>
    %39 = vector.broadcast %36 : vector<8x8x1xi32> to vector<8x8x128xi32>
    %40 = vector.broadcast %38 : vector<1x1x128xi32> to vector<8x8x128xi32>
    %41 = arith.cmpi eq, %39, %40 : vector<8x8x128xi32>
    %42 = arith.ori %35, %41 : vector<8x8x128xi1>
    %43 = vector.extract_strided_slice %16 {offsets = [0, 0, 3], sizes = [8, 8, 1], strides = [1, 1, 1]} : vector<8x8x5xi32> to vector<8x8x1xi32>
    %c6_i32 = arith.constant 6 : i32
    %44 = vector.broadcast %c6_i32 : i32 to vector<1x1x128xi32>
    %45 = arith.subi %22, %44 : vector<1x1x128xi32>
    %46 = vector.broadcast %43 : vector<8x8x1xi32> to vector<8x8x128xi32>
    %47 = vector.broadcast %45 : vector<1x1x128xi32> to vector<8x8x128xi32>
    %48 = arith.cmpi eq, %46, %47 : vector<8x8x128xi32>
    %49 = arith.ori %42, %48 : vector<8x8x128xi1>
    %50 = vector.extract_strided_slice %16 {offsets = [0, 0, 4], sizes = [8, 8, 1], strides = [1, 1, 1]} : vector<8x8x5xi32> to vector<8x8x1xi32>
    %c17_i32 = arith.constant 17 : i32
    %51 = vector.broadcast %c17_i32 : i32 to vector<1x1x128xi32>
    %52 = arith.subi %22, %51 : vector<1x1x128xi32>
    %53 = vector.broadcast %50 : vector<8x8x1xi32> to vector<8x8x128xi32>
    %54 = vector.broadcast %52 : vector<1x1x128xi32> to vector<8x8x128xi32>
    %55 = arith.cmpi eq, %53, %54 : vector<8x8x128xi32>
    %56 = arith.ori %49, %55 : vector<8x8x128xi1>
    %57 = vector.extract_strided_slice %21 {offsets = [0, 0, 0], sizes = [8, 8, 1], strides = [1, 1, 1]} : vector<8x8x2xi32> to vector<8x8x1xi32>
    %c51_i32 = arith.constant 51 : i32
    %58 = vector.broadcast %c51_i32 : i32 to vector<1x1x128xi32>
    %59 = arith.subi %22, %58 : vector<1x1x128xi32>
    %60 = vector.broadcast %57 : vector<8x8x1xi32> to vector<8x8x128xi32>
    %61 = vector.broadcast %59 : vector<1x1x128xi32> to vector<8x8x128xi32>
    %62 = arith.cmpi eq, %60, %61 : vector<8x8x128xi32>
    %63 = arith.ori %56, %62 : vector<8x8x128xi1>
    %64 = vector.extract_strided_slice %21 {offsets = [0, 0, 1], sizes = [8, 8, 1], strides = [1, 1, 1]} : vector<8x8x2xi32> to vector<8x8x1xi32>
    %c70_i32 = arith.constant 70 : i32
    %65 = vector.broadcast %c70_i32 : i32 to vector<1x1x128xi32>
    %66 = arith.subi %22, %65 : vector<1x1x128xi32>
    %67 = vector.broadcast %64 : vector<8x8x1xi32> to vector<8x8x128xi32>
    %68 = vector.broadcast %66 : vector<1x1x128xi32> to vector<8x8x128xi32>
    %69 = arith.cmpi eq, %67, %68 : vector<8x8x128xi32>
    %70 = arith.ori %63, %69 : vector<8x8x128xi1>
    %c0_10 = arith.constant 0 : index
    %c0_11 = arith.constant 0 : index
    %71 = vector.load %arg20[%c0_10, %c0_11] : memref<8x128xf32, #tpu.memory_space<vmem>>, vector<8x128xf32>
    %72 = arith.extui %70 : vector<8x8x128xi1> to vector<8x8x128xi32>
    %73 = arith.sitofp %72 : vector<8x8x128xi32> to vector<8x8x128xf32>
    %cst = arith.constant dense<0.000000e+00> : vector<8x128xf32>
    %74 = vector.multi_reduction <add>, %73, %cst [1] : vector<8x8x128xf32> to vector<8x128xf32>
    %75 = arith.addf %71, %74 : vector<8x128xf32>
    %c0_12 = arith.constant 0 : index
    %c0_13 = arith.constant 0 : index
    %76 = vector.load %arg20[%c0_12, %c0_13] : memref<8x128xf32, #tpu.memory_space<vmem>>, vector<8x128xf32>
    tpu.vector_store %arg20[%c0_12, %c0_13], %75 {strides = array<i32>} : memref<8x128xf32, #tpu.memory_space<vmem>>, vector<8x128xf32>,
    %77 = arith.extui %11 : vector<8x8x1xi1> to vector<8x8x1xi32>
    %78 = arith.sitofp %77 : vector<8x8x1xi32> to vector<8x8x1xf32>
    %c0_14 = arith.constant 0 : index
    %c0_15 = arith.constant 0 : index
    %c0_16 = arith.constant 0 : index
    %79 = vector.load %arg2[%c0_14, %c0_15, %c0_16] : memref<8x8x3xf32, #tpu.memory_space<vmem>>, vector<8x8x3xf32>
    %80 = vector.shape_cast %79 : vector<8x8x3xf32> to vector<64x3xf32>
    %c0_17 = arith.constant 0 : index
    %c0_18 = arith.constant 0 : index
    %81 = vector.load %arg7[%c0_17, %c0_18] : memref<3x32xf32, #tpu.memory_space<vmem>>, vector<3x32xf32>
    %cst_19 = arith.constant dense<0.000000e+00> : vector<64x32xf32>
    %82 = tpu.matmul %80, %81, %cst_19 {dimension_numbers = #tpu.dot_dimension_numbers<[1], [0], [0], [1], [0, 0, 1, 1], [], []>} : vector<64x3xf32>, vector<3x32xf32>, vector<64x32xf32> -> vector<64x32xf32>
    %c0_20 = arith.constant 0 : index
    %c0_21 = arith.constant 0 : index
    %83 = vector.load %arg8[%c0_20, %c0_21] : memref<1x32xf32, #tpu.memory_space<vmem>>, vector<1x32xf32>
    %84 = vector.broadcast %83 : vector<1x32xf32> to vector<64x32xf32>
    %85 = arith.addf %82, %84 : vector<64x32xf32>
    %cst_22 = arith.constant 0.000000e+00 : f32
    %86 = vector.broadcast %cst_22 : f32 to vector<64x32xf32>
    %87 = arith.maximumf %85, %86 : vector<64x32xf32>
    %c0_23 = arith.constant 0 : index
    %c0_24 = arith.constant 0 : index
    %c0_25 = arith.constant 0 : index
    %88 = vector.load %arg3[%c0_23, %c0_24, %c0_25] : memref<8x8x2xf32, #tpu.memory_space<vmem>>, vector<8x8x2xf32>
    %89 = vector.shape_cast %88 : vector<8x8x2xf32> to vector<64x2xf32>
    %c0_26 = arith.constant 0 : index
    %c0_27 = arith.constant 0 : index
    %90 = vector.load %arg9[%c0_26, %c0_27] : memref<2x32xf32, #tpu.memory_space<vmem>>, vector<2x32xf32>
    %cst_28 = arith.constant dense<0.000000e+00> : vector<64x32xf32>
    %91 = tpu.matmul %89, %90, %cst_28 {dimension_numbers = #tpu.dot_dimension_numbers<[1], [0], [0], [1], [0, 0, 1, 1], [], []>} : vector<64x2xf32>, vector<2x32xf32>, vector<64x32xf32> -> vector<64x32xf32>
    %c0_29 = arith.constant 0 : index
    %c0_30 = arith.constant 0 : index
    %92 = vector.load %arg10[%c0_29, %c0_30] : memref<1x32xf32, #tpu.memory_space<vmem>>, vector<1x32xf32>
    %93 = vector.broadcast %92 : vector<1x32xf32> to vector<64x32xf32>
    %94 = arith.addf %91, %93 : vector<64x32xf32>
    %cst_31 = arith.constant 0.000000e+00 : f32
    %95 = vector.broadcast %cst_31 : f32 to vector<64x32xf32>
    %96 = arith.maximumf %94, %95 : vector<64x32xf32>
    %c0_32 = arith.constant 0 : index
    %c0_33 = arith.constant 0 : index
    %97 = vector.load %arg21[%c0_32, %c0_33] : memref<8x32xf32, #tpu.memory_space<vmem>>, vector<8x32xf32>
    %98 = vector.shape_cast %87 : vector<64x32xf32> to vector<8x8x32xf32>
    %99 = vector.broadcast %78 : vector<8x8x1xf32> to vector<8x8x32xf32>
    %100 = arith.mulf %98, %99 : vector<8x8x32xf32>
    %cst_34 = arith.constant dense<0.000000e+00> : vector<8x32xf32>
    %101 = vector.multi_reduction <add>, %100, %cst_34 [1] : vector<8x8x32xf32> to vector<8x32xf32>
    %102 = arith.addf %97, %101 : vector<8x32xf32>
    %c0_35 = arith.constant 0 : index
    %c0_36 = arith.constant 0 : index
    %103 = vector.load %arg21[%c0_35, %c0_36] : memref<8x32xf32, #tpu.memory_space<vmem>>, vector<8x32xf32>
    tpu.vector_store %arg21[%c0_35, %c0_36], %102 {strides = array<i32>} : memref<8x32xf32, #tpu.memory_space<vmem>>, vector<8x32xf32>,
    %c0_37 = arith.constant 0 : index
    %c0_38 = arith.constant 0 : index
    %104 = vector.load %arg22[%c0_37, %c0_38] : memref<8x32xf32, #tpu.memory_space<vmem>>, vector<8x32xf32>
    %105 = vector.shape_cast %96 : vector<64x32xf32> to vector<8x8x32xf32>
    %106 = vector.broadcast %78 : vector<8x8x1xf32> to vector<8x8x32xf32>
    %107 = arith.mulf %105, %106 : vector<8x8x32xf32>
    %cst_39 = arith.constant dense<0.000000e+00> : vector<8x32xf32>
    %108 = vector.multi_reduction <add>, %107, %cst_39 [1] : vector<8x8x32xf32> to vector<8x32xf32>
    %109 = arith.addf %104, %108 : vector<8x32xf32>
    %c0_40 = arith.constant 0 : index
    %c0_41 = arith.constant 0 : index
    %110 = vector.load %arg22[%c0_40, %c0_41] : memref<8x32xf32, #tpu.memory_space<vmem>>, vector<8x32xf32>
    tpu.vector_store %arg22[%c0_40, %c0_41], %109 {strides = array<i32>} : memref<8x32xf32, #tpu.memory_space<vmem>>, vector<8x32xf32>,
    %c0_i32_42 = arith.constant 0 : i32
    %111 = arith.cmpi eq, %arg1, %c0_i32_42 : i32
    %112 = arith.extui %111 : i1 to i32
    %c0_i32_43 = arith.constant 0 : i32
    %113 = arith.cmpi ne, %112, %c0_i32_43 : i32
    scf.if %113 {
      %c1_i32 = arith.constant 1 : i32
      %114 = vector.broadcast %c1_i32 : i32 to vector<8x1xi32>
      %115 = arith.maxsi %3, %114 : vector<8x1xi32>
      %116 = arith.sitofp %115 : vector<8x1xi32> to vector<8x1xf32>
      %117 = tpu.reciprocal %116 {approx = true} : vector<8x1xf32> -> vector<8x1xf32>
      %c0_44 = arith.constant 0 : index
      %c0_45 = arith.constant 0 : index
      %118 = vector.load %arg20[%c0_44, %c0_45] : memref<8x128xf32, #tpu.memory_space<vmem>>, vector<8x128xf32>
      %119 = vector.broadcast %117 : vector<8x1xf32> to vector<8x128xf32>
      %120 = arith.mulf %118, %119 : vector<8x128xf32>
      %c0_46 = arith.constant 0 : index
      %c0_47 = arith.constant 0 : index
      %121 = vector.load %arg11[%c0_46, %c0_47] : memref<128x64xf32, #tpu.memory_space<vmem>>, vector<128x64xf32>
      %cst_48 = arith.constant dense<0.000000e+00> : vector<8x64xf32>
      %122 = tpu.matmul %120, %121, %cst_48 {dimension_numbers = #tpu.dot_dimension_numbers<[1], [0], [0], [1], [0, 0, 1, 1], [], []>} : vector<8x128xf32>, vector<128x64xf32>, vector<8x64xf32> -> vector<8x64xf32>
      %c0_49 = arith.constant 0 : index
      %c0_50 = arith.constant 0 : index
      %123 = vector.load %arg21[%c0_49, %c0_50] : memref<8x32xf32, #tpu.memory_space<vmem>>, vector<8x32xf32>
      %124 = vector.broadcast %117 : vector<8x1xf32> to vector<8x32xf32>
      %125 = arith.mulf %123, %124 : vector<8x32xf32>
      %c0_51 = arith.constant 0 : index
      %c0_52 = arith.constant 0 : index
      %126 = vector.load %arg12[%c0_51, %c0_52] : memref<32x64xf32, #tpu.memory_space<vmem>>, vector<32x64xf32>
      %cst_53 = arith.constant dense<0.000000e+00> : vector<8x64xf32>
      %127 = tpu.matmul %125, %126, %cst_53 {dimension_numbers = #tpu.dot_dimension_numbers<[1], [0], [0], [1], [0, 0, 1, 1], [], []>} : vector<8x32xf32>, vector<32x64xf32>, vector<8x64xf32> -> vector<8x64xf32>
      %128 = arith.addf %122, %127 : vector<8x64xf32>
      %c0_54 = arith.constant 0 : index
      %c0_55 = arith.constant 0 : index
      %129 = vector.load %arg22[%c0_54, %c0_55] : memref<8x32xf32, #tpu.memory_space<vmem>>, vector<8x32xf32>
      %130 = vector.broadcast %117 : vector<8x1xf32> to vector<8x32xf32>
      %131 = arith.mulf %129, %130 : vector<8x32xf32>
      %c0_56 = arith.constant 0 : index
      %c0_57 = arith.constant 0 : index
      %132 = vector.load %arg13[%c0_56, %c0_57] : memref<32x64xf32, #tpu.memory_space<vmem>>, vector<32x64xf32>
      %cst_58 = arith.constant dense<0.000000e+00> : vector<8x64xf32>
      %133 = tpu.matmul %131, %132, %cst_58 {dimension_numbers = #tpu.dot_dimension_numbers<[1], [0], [0], [1], [0, 0, 1, 1], [], []>} : vector<8x32xf32>, vector<32x64xf32>, vector<8x64xf32> -> vector<8x64xf32>
      %134 = arith.addf %128, %133 : vector<8x64xf32>
      %c0_59 = arith.constant 0 : index
      %c0_60 = arith.constant 0 : index
      %135 = vector.load %arg14[%c0_59, %c0_60] : memref<1x64xf32, #tpu.memory_space<vmem>>, vector<1x64xf32>
      %136 = vector.broadcast %135 : vector<1x64xf32> to vector<8x64xf32>
      %137 = arith.addf %134, %136 : vector<8x64xf32>
      %cst_61 = arith.constant 0.000000e+00 : f32
      %138 = vector.broadcast %cst_61 : f32 to vector<8x64xf32>
      %139 = arith.maximumf %137, %138 : vector<8x64xf32>
      %c0_62 = arith.constant 0 : index
      %c0_63 = arith.constant 0 : index
      %140 = vector.load %arg15[%c0_62, %c0_63] : memref<64x64xf32, #tpu.memory_space<vmem>>, vector<64x64xf32>
      %cst_64 = arith.constant dense<0.000000e+00> : vector<8x64xf32>
      %141 = tpu.matmul %139, %140, %cst_64 {dimension_numbers = #tpu.dot_dimension_numbers<[1], [0], [0], [1], [0, 0, 1, 1], [], []>} : vector<8x64xf32>, vector<64x64xf32>, vector<8x64xf32> -> vector<8x64xf32>
      %c0_65 = arith.constant 0 : index
      %c0_66 = arith.constant 0 : index
      %142 = vector.load %arg16[%c0_65, %c0_66] : memref<1x64xf32, #tpu.memory_space<vmem>>, vector<1x64xf32>
      %143 = vector.broadcast %142 : vector<1x64xf32> to vector<8x64xf32>
      %144 = arith.addf %141, %143 : vector<8x64xf32>
      %cst_67 = arith.constant 0.000000e+00 : f32
      %145 = vector.broadcast %cst_67 : f32 to vector<8x64xf32>
      %146 = arith.maximumf %144, %145 : vector<8x64xf32>
      %c0_68 = arith.constant 0 : index
      %c0_69 = arith.constant 0 : index
      %147 = vector.load %arg17[%c0_68, %c0_69] : memref<64x128xf32, #tpu.memory_space<vmem>>, vector<64x128xf32>
      %cst_70 = arith.constant dense<0.000000e+00> : vector<8x128xf32>
      %148 = tpu.matmul %146, %147, %cst_70 {dimension_numbers = #tpu.dot_dimension_numbers<[1], [0], [0], [1], [0, 0, 1, 1], [], []>} : vector<8x64xf32>, vector<64x128xf32>, vector<8x128xf32> -> vector<8x128xf32>
      %c0_71 = arith.constant 0 : index
      %c0_72 = arith.constant 0 : index
      %149 = vector.load %arg18[%c0_71, %c0_72] : memref<1x128xf32, #tpu.memory_space<vmem>>, vector<1x128xf32>
      %150 = vector.broadcast %149 : vector<1x128xf32> to vector<8x128xf32>
      %151 = arith.addf %148, %150 : vector<8x128xf32>
      %c0_73 = arith.constant 0 : index
      %c0_74 = arith.constant 0 : index
      %152 = vector.load %arg19[%c0_73, %c0_74] : memref<8x128xf32, #tpu.memory_space<vmem>>, vector<8x128xf32>
      tpu.vector_store %arg19[%c0_73, %c0_74], %151 {strides = array<i32>} : memref<8x128xf32, #tpu.memory_space<vmem>>, vector<8x128xf32>,
    } else {
    }
    return
  }
  func.func @transform_0(%arg0: i32, %arg1: i32) -> (i32, i32, i32) {
    %c0_i32 = arith.constant 0 : i32
    %c0_i32_0 = arith.constant 0 : i32
    return %arg0, %arg1, %c0_i32 : i32, i32, i32
  }
  func.func @transform_1(%arg0: i32, %arg1: i32) -> (i32, i32, i32) {
    %c0_i32 = arith.constant 0 : i32
    %c0_i32_0 = arith.constant 0 : i32
    return %arg0, %arg1, %c0_i32 : i32, i32, i32
  }
  func.func @transform_2(%arg0: i32, %arg1: i32) -> (i32, i32, i32) {
    %c0_i32 = arith.constant 0 : i32
    %c0_i32_0 = arith.constant 0 : i32
    return %arg0, %arg1, %c0_i32 : i32, i32, i32
  }
  func.func @transform_3(%arg0: i32, %arg1: i32) -> (i32, i32, i32) {
    %c0_i32 = arith.constant 0 : i32
    %c0_i32_0 = arith.constant 0 : i32
    return %arg0, %arg1, %c0_i32 : i32, i32, i32
  }
  func.func @transform_4(%arg0: i32, %arg1: i32) -> (i32, i32) {
    %c0_i32 = arith.constant 0 : i32
    %c0_i32_0 = arith.constant 0 : i32
    return %arg0, %c0_i32 : i32, i32
  }
  func.func @transform_5(%arg0: i32, %arg1: i32) -> (i32, i32) {
    %c0_i32 = arith.constant 0 : i32
    %c0_i32_0 = arith.constant 0 : i32
    %c0_i32_1 = arith.constant 0 : i32
    return %c0_i32, %c0_i32_0 : i32, i32
  }
  func.func @transform_6(%arg0: i32, %arg1: i32) -> (i32, i32) {
    %c0_i32 = arith.constant 0 : i32
    %c0_i32_0 = arith.constant 0 : i32
    %c0_i32_1 = arith.constant 0 : i32
    return %c0_i32, %c0_i32_0 : i32, i32
  }
  func.func @transform_7(%arg0: i32, %arg1: i32) -> (i32, i32) {
    %c0_i32 = arith.constant 0 : i32
    %c0_i32_0 = arith.constant 0 : i32
    %c0_i32_1 = arith.constant 0 : i32
    return %c0_i32, %c0_i32_0 : i32, i32
  }
  func.func @transform_8(%arg0: i32, %arg1: i32) -> (i32, i32) {
    %c0_i32 = arith.constant 0 : i32
    %c0_i32_0 = arith.constant 0 : i32
    %c0_i32_1 = arith.constant 0 : i32
    return %c0_i32, %c0_i32_0 : i32, i32
  }
  func.func @transform_9(%arg0: i32, %arg1: i32) -> (i32, i32) {
    %c0_i32 = arith.constant 0 : i32
    %c0_i32_0 = arith.constant 0 : i32
    %c0_i32_1 = arith.constant 0 : i32
    return %c0_i32, %c0_i32_0 : i32, i32
  }
  func.func @transform_10(%arg0: i32, %arg1: i32) -> (i32, i32) {
    %c0_i32 = arith.constant 0 : i32
    %c0_i32_0 = arith.constant 0 : i32
    %c0_i32_1 = arith.constant 0 : i32
    return %c0_i32, %c0_i32_0 : i32, i32
  }
  func.func @transform_11(%arg0: i32, %arg1: i32) -> (i32, i32) {
    %c0_i32 = arith.constant 0 : i32
    %c0_i32_0 = arith.constant 0 : i32
    %c0_i32_1 = arith.constant 0 : i32
    return %c0_i32, %c0_i32_0 : i32, i32
  }
  func.func @transform_12(%arg0: i32, %arg1: i32) -> (i32, i32) {
    %c0_i32 = arith.constant 0 : i32
    %c0_i32_0 = arith.constant 0 : i32
    %c0_i32_1 = arith.constant 0 : i32
    return %c0_i32, %c0_i32_0 : i32, i32
  }
  func.func @transform_13(%arg0: i32, %arg1: i32) -> (i32, i32) {
    %c0_i32 = arith.constant 0 : i32
    %c0_i32_0 = arith.constant 0 : i32
    %c0_i32_1 = arith.constant 0 : i32
    return %c0_i32, %c0_i32_0 : i32, i32
  }
  func.func @transform_14(%arg0: i32, %arg1: i32) -> (i32, i32) {
    %c0_i32 = arith.constant 0 : i32
    %c0_i32_0 = arith.constant 0 : i32
    %c0_i32_1 = arith.constant 0 : i32
    return %c0_i32, %c0_i32_0 : i32, i32
  }
  func.func @transform_15(%arg0: i32, %arg1: i32) -> (i32, i32) {
    %c0_i32 = arith.constant 0 : i32
    %c0_i32_0 = arith.constant 0 : i32
    %c0_i32_1 = arith.constant 0 : i32
    return %c0_i32, %c0_i32_0 : i32, i32
  }
  func.func @transform_16(%arg0: i32, %arg1: i32) -> (i32, i32) {
    %c0_i32 = arith.constant 0 : i32
    %c0_i32_0 = arith.constant 0 : i32
    %c0_i32_1 = arith.constant 0 : i32
    return %c0_i32, %c0_i32_0 : i32, i32
  }
  func.func @transform_17(%arg0: i32, %arg1: i32) -> (i32, i32) {
    %c0_i32 = arith.constant 0 : i32
    %c0_i32_0 = arith.constant 0 : i32
    return %arg0, %c0_i32 : i32, i32
  }
}

</mosaic_0001>

<llo_original>
// kernel: tpu_custom_call.1
$region0: #{tpu_custom_call.1}
  #allocation0 [shape = 'u32[]', space=smem, size = 0x4, offset = 0x4, fixed_abs, tag = 'smem constant byte address 0x4 - core index']
  #allocation1 [shape = 'u32[72,128]{1,0:T(1,128)}', space=vmem, size = 0x9000, scoped, tag = 'internal scratch']
  #allocation2 [shape = 'f32[8,128]{1,0:T(8,128)}', space=vmem, size = 0x1000, scoped, tag = 'scratch operand']
  #allocation3 [shape = 'f32[8,32]{1,0:T(8,128)}', space=vmem, size = 0x1000, scoped, tag = 'scratch operand']
  #allocation4 [shape = 'f32[8,32]{1,0:T(8,128)}', space=vmem, size = 0x1000, scoped, tag = 'scratch operand']
  %s0 = inlined_call_operand.vmem [shape: f32[8,8,3], index: 0, kind: input, shape index: {}]
  %s1 = inlined_call_operand.vmem [shape: f32[8,8,2], index: 1, kind: input, shape index: {}]
  %s2 = inlined_call_operand.vmem [shape: s32[8,8,5], index: 2, kind: input, shape index: {}]
  %s3 = inlined_call_operand.vmem [shape: s32[8,8,2], index: 3, kind: input, shape index: {}]
  %s4 = inlined_call_operand.vmem [shape: s32[8,1], index: 4, kind: input, shape index: {}]
  %s5 = inlined_call_operand.vmem [shape: f32[3,32], index: 5, kind: input, shape index: {}]
  %s6 = inlined_call_operand.vmem [shape: f32[1,32], index: 6, kind: input, shape index: {}]
  %s7 = inlined_call_operand.vmem [shape: f32[2,32], index: 7, kind: input, shape index: {}]
  %s8 = inlined_call_operand.vmem [shape: f32[1,32], index: 8, kind: input, shape index: {}]
  %s9 = inlined_call_operand.vmem [shape: f32[128,64], index: 9, kind: input, shape index: {}]
  %s10 = inlined_call_operand.vmem [shape: f32[32,64], index: 10, kind: input, shape index: {}]
  %s11 = inlined_call_operand.vmem [shape: f32[32,64], index: 11, kind: input, shape index: {}]
  %s12 = inlined_call_operand.vmem [shape: f32[1,64], index: 12, kind: input, shape index: {}]
  %s13 = inlined_call_operand.vmem [shape: f32[64,64], index: 13, kind: input, shape index: {}]
  %s14 = inlined_call_operand.vmem [shape: f32[1,64], index: 14, kind: input, shape index: {}]
  %s15 = inlined_call_operand.vmem [shape: f32[64,128], index: 15, kind: input, shape index: {}]
  %s16 = inlined_call_operand.vmem [shape: f32[1,128], index: 16, kind: input, shape index: {}]
  %s17 = inlined_call_operand.hbm [shape: f32[8,128], index: 17, kind: output, shape index: {}]
  %s18 = sld [smem:[#allocation0]]
  $region86: #{tpu_custom_call.1} parent=0
    _
  %s20 = ssub.s32 1, %s18
  %s21 = scalar_select 0, %s20, %s18
  $region1: #{tpu_custom_call.1} parent=0
    #allocation5 [shape = 'u8[4096]{0}', space=vmem, size = 0x1000, scoped, tag = 'output window, operand 0, single buffered']
    #allocation6 [shape = 's32[1]{0}', space=sflag, size = 0x4, scoped, tag = 'scoped memory for tpu_custom_call.1']
    %22 = vsyncpa [#allocation6], 0
    // Predicated region
    $region2: #{tpu_custom_call.1} parent=1 // pred_check
      _
    $region3: #{tpu_custom_call.1} parent=1 // pred_check_branch
      %24 = sbr.rel (0) target = $region5
    $region4: #{tpu_custom_call.1} parent=1 // pred_region
      _
    $region5: #{tpu_custom_call.1} parent=1 // pred_fallthru
      _
    // Predicated region
    $region6: #{tpu_custom_call.1} parent=1 // pred_check
      _
    $region7: #{tpu_custom_call.1} parent=1 // pred_check_branch
      %26 = sbr.rel (0) target = $region9
    $region8: #{tpu_custom_call.1} parent=1 // pred_region
      _
    $region9: #{tpu_custom_call.1} parent=1 // pred_fallthru
      _
    // Predicated region
    $region10: #{tpu_custom_call.1} parent=1 // pred_check
      _
    $region11: #{tpu_custom_call.1} parent=1 // pred_check_branch
      %28 = sbr.rel (0) target = $region13
    $region12: #{tpu_custom_call.1} parent=1 // pred_region
      _
    $region13: #{tpu_custom_call.1} parent=1 // pred_fallthru
      _
    // Predicated region
    $region14: #{tpu_custom_call.1} parent=1 // pred_check
      _
    $region15: #{tpu_custom_call.1} parent=1 // pred_check_branch
      %30 = sbr.rel (0) target = $region17
    $region16: #{tpu_custom_call.1} parent=1 // pred_region
      _
    $region17: #{tpu_custom_call.1} parent=1 // pred_fallthru
      _
    // Predicated region
    $region18: #{tpu_custom_call.1} parent=1 // pred_check
      _
    $region19: #{tpu_custom_call.1} parent=1 // pred_check_branch
      %32 = sbr.rel (0) target = $region21
    $region20: #{tpu_custom_call.1} parent=1 // pred_region
      _
    $region21: #{tpu_custom_call.1} parent=1 // pred_fallthru
      _
    // Predicated region
    $region22: #{tpu_custom_call.1} parent=1 // pred_check
      _
    $region23: #{tpu_custom_call.1} parent=1 // pred_check_branch
      %34 = sbr.rel (0) target = $region25
    $region24: #{tpu_custom_call.1} parent=1 // pred_region
      _
    $region25: #{tpu_custom_call.1} parent=1 // pred_fallthru
      _
    // Predicated region
    $region26: #{tpu_custom_call.1} parent=1 // pred_check
      _
    $region27: #{tpu_custom_call.1} parent=1 // pred_check_branch
      %36 = sbr.rel (0) target = $region29
    $region28: #{tpu_custom_call.1} parent=1 // pred_region
      _
    $region29: #{tpu_custom_call.1} parent=1 // pred_fallthru
      _
    // Predicated region
    $region30: #{tpu_custom_call.1} parent=1 // pred_check
      _
    $region31: #{tpu_custom_call.1} parent=1 // pred_check_branch
      %38 = sbr.rel (0) target = $region33
    $region32: #{tpu_custom_call.1} parent=1 // pred_region
      _
    $region33: #{tpu_custom_call.1} parent=1 // pred_fallthru
      _
    // Predicated region
    $region34: #{tpu_custom_call.1} parent=1 // pred_check
      _
    $region35: #{tpu_custom_call.1} parent=1 // pred_check_branch
      %40 = sbr.rel (0) target = $region37
    $region36: #{tpu_custom_call.1} parent=1 // pred_region
      _
    $region37: #{tpu_custom_call.1} parent=1 // pred_fallthru
      _
    // Predicated region
    $region38: #{tpu_custom_call.1} parent=1 // pred_check
      _
    $region39: #{tpu_custom_call.1} parent=1 // pred_check_branch
      %42 = sbr.rel (0) target = $region41
    $region40: #{tpu_custom_call.1} parent=1 // pred_region
      _
    $region41: #{tpu_custom_call.1} parent=1 // pred_fallthru
      _
    // Predicated region
    $region42: #{tpu_custom_call.1} parent=1 // pred_check
      _
    $region43: #{tpu_custom_call.1} parent=1 // pred_check_branch
      %44 = sbr.rel (0) target = $region45
    $region44: #{tpu_custom_call.1} parent=1 // pred_region
      _
    $region45: #{tpu_custom_call.1} parent=1 // pred_fallthru
      _
    // Predicated region
    $region46: #{tpu_custom_call.1} parent=1 // pred_check
      _
    $region47: #{tpu_custom_call.1} parent=1 // pred_check_branch
      %46 = sbr.rel (0) target = $region49
    $region48: #{tpu_custom_call.1} parent=1 // pred_region
      _
    $region49: #{tpu_custom_call.1} parent=1 // pred_fallthru
      _
    // Predicated region
    $region50: #{tpu_custom_call.1} parent=1 // pred_check
      _
    $region51: #{tpu_custom_call.1} parent=1 // pred_check_branch
      %48 = sbr.rel (0) target = $region53
    $region52: #{tpu_custom_call.1} parent=1 // pred_region
      _
    $region53: #{tpu_custom_call.1} parent=1 // pred_fallthru
      _
    // Predicated region
    $region54: #{tpu_custom_call.1} parent=1 // pred_check
      _
    $region55: #{tpu_custom_call.1} parent=1 // pred_check_branch
      %50 = sbr.rel (0) target = $region57
    $region56: #{tpu_custom_call.1} parent=1 // pred_region
      _
    $region57: #{tpu_custom_call.1} parent=1 // pred_fallthru
      _
    // Predicated region
    $region58: #{tpu_custom_call.1} parent=1 // pred_check
      _
    $region59: #{tpu_custom_call.1} parent=1 // pred_check_branch
      %52 = sbr.rel (0) target = $region61
    $region60: #{tpu_custom_call.1} parent=1 // pred_region
      _
    $region61: #{tpu_custom_call.1} parent=1 // pred_fallthru
      _
    // Predicated region
    $region62: #{tpu_custom_call.1} parent=1 // pred_check
      _
    $region63: #{tpu_custom_call.1} parent=1 // pred_check_branch
      %54 = sbr.rel (0) target = $region65
    $region64: #{tpu_custom_call.1} parent=1 // pred_region
      _
    $region65: #{tpu_custom_call.1} parent=1 // pred_fallthru
      _
    // Predicated region
    $region66: #{tpu_custom_call.1} parent=1 // pred_check
      _
    $region67: #{tpu_custom_call.1} parent=1 // pred_check_branch
      %56 = sbr.rel (0) target = $region69
    $region68: #{tpu_custom_call.1} parent=1 // pred_region
      _
    $region69: #{tpu_custom_call.1} parent=1 // pred_fallthru
      _
    %p57 = scmp.eq.s32.totalorder 0, 0
    // Predicated region
    $region70: #{tpu_custom_call.1} parent=1 // pred_check
      %p58 = pneg %p57
    $region71: #{tpu_custom_call.1} parent=1 // pred_check_branch
      %60 = sbr.rel (%p58) target = $region73
    $region72: #{tpu_custom_call.1} parent=1 // pred_region
      %61 = vst [vmem:[#allocation2] sm:$0xff] 0.0
      %vm62 = vcmask 261120
      %63 = vst.msk [vmem:[#allocation3] sm:$0xff] %vm62, 0.0
      %64 = vst.msk [vmem:[#allocation4] sm:$0xff] %vm62, 0.0
    $region73: #{tpu_custom_call.1} parent=1 // pred_fallthru
      _
    %v65 = vld [vmem:[%s4] sm:$0xff]
    %v66 = vlaneseq
    %v67 = vshrl.u32 %v66, 7
    %s68 = smul.u32 0, 8
    %v69 = vstv %s68
    %v70 = vadd.s32 %v67, %v69
    %v71 = vrot.slane %v65, 1
    %v72 = vrot.slane %v65, 2
    %v73 = vrot.slane %v65, 3
    %v74 = vrot.slane %v65, 4
    %v75 = vrot.slane %v65, 5
    %v76 = vrot.slane %v65, 6
    %v77 = vrot.slane %v65, 7
    %v78 = vperm.slane %v65, 0
    %v79 = vperm.slane %v71, 0
    %v80 = vperm.slane %v72, 0
    %v81 = vperm.slane %v73, 0
    %v82 = vperm.slane %v74, 0
    %v83 = vperm.slane %v75, 0
    %v84 = vperm.slane %v76, 0
    %v85 = vperm.slane %v77, 0
    %vm86 = vcmp.lt.s32.totalorder %v70, %v78
    %vm87 = vcmp.lt.s32.totalorder %v70, %v79
    %vm88 = vcmp.lt.s32.totalorder %v70, %v80
    %vm89 = vcmp.lt.s32.totalorder %v70, %v81
    %vm90 = vcmp.lt.s32.totalorder %v70, %v82
    %vm91 = vcmp.lt.s32.totalorder %v70, %v83
    %vm92 = vcmp.lt.s32.totalorder %v70, %v84
    %vm93 = vcmp.lt.s32.totalorder %v70, %v85
    %v94 = vld [vmem:[%s2] sm:$0xff]
    %v95 = vld [vmem:[%s2 + $0x8] sm:$0xff]
    %v96 = vld [vmem:[%s2 + $0x10] sm:$0xff]
    %v97 = vld [vmem:[%s2 + $0x18] sm:$0xff]
    %v98 = vld [vmem:[%s2 + $0x20] sm:$0xff]
    %v99 = vld [vmem:[%s2 + $0x28] sm:$0xff]
    %v100 = vld [vmem:[%s2 + $0x30] sm:$0xff]
    %v101 = vld [vmem:[%s2 + $0x38] sm:$0xff]
    %v102 = vsel %vm86, 1, 0
    %v103 = vsel %vm87, 1, 0
    %v104 = vsel %vm88, 1, 0
    %v105 = vsel %vm89, 1, 0
    %v106 = vsel %vm90, 1, 0
    %v107 = vsel %vm91, 1, 0
    %v108 = vsel %vm92, 1, 0
    %v109 = vsel %vm93, 1, 0
    %110 = vset.pattern.permute.xlu0 0
    %111 = vperm.xlu0 %110, %v102
    %v112 = vpop.permute.xlu0 %111
    %113 = vset.pattern.permute.xlu0 0
    %114 = vperm.xlu0 %113, %v103
    %v115 = vpop.permute.xlu0 %114
    %116 = vset.pattern.permute.xlu0 0
    %117 = vperm.xlu0 %116, %v104
    %v118 = vpop.permute.xlu0 %117
    %119 = vset.pattern.permute.xlu0 0
    %120 = vperm.xlu0 %119, %v105
    %v121 = vpop.permute.xlu0 %120
    %122 = vset.pattern.permute.xlu0 0
    %123 = vperm.xlu0 %122, %v106
    %v124 = vpop.permute.xlu0 %123
    %125 = vset.pattern.permute.xlu0 0
    %126 = vperm.xlu0 %125, %v107
    %v127 = vpop.permute.xlu0 %126
    %128 = vset.pattern.permute.xlu0 0
    %129 = vperm.xlu0 %128, %v108
    %v130 = vpop.permute.xlu0 %129
    %131 = vset.pattern.permute.xlu0 0
    %132 = vperm.xlu0 %131, %v109
    %v133 = vpop.permute.xlu0 %132
    %vm134 = vcmp.eq.s32.totalorder %v112, 1
    %vm135 = vcmp.eq.s32.totalorder %v115, 1
    %vm136 = vcmp.eq.s32.totalorder %v118, 1
    %vm137 = vcmp.eq.s32.totalorder %v121, 1
    %vm138 = vcmp.eq.s32.totalorder %v124, 1
    %vm139 = vcmp.eq.s32.totalorder %v127, 1
    %vm140 = vcmp.eq.s32.totalorder %v130, 1
    %vm141 = vcmp.eq.s32.totalorder %v133, 1
    %v142 = vsel %vm134, %v94, 4293918720
    %v143 = vsel %vm135, %v95, 4293918720
    %v144 = vsel %vm136, %v96, 4293918720
    %v145 = vsel %vm137, %v97, 4293918720
    %v146 = vsel %vm138, %v98, 4293918720
    %v147 = vsel %vm139, %v99, 4293918720
    %v148 = vsel %vm140, %v100, 4293918720
    %v149 = vsel %vm141, %v101, 4293918720
    %v150 = vld [vmem:[%s3] sm:$0xff]
    %v151 = vld [vmem:[%s3 + $0x8] sm:$0xff]
    %v152 = vld [vmem:[%s3 + $0x10] sm:$0xff]
    %v153 = vld [vmem:[%s3 + $0x18] sm:$0xff]
    %v154 = vld [vmem:[%s3 + $0x20] sm:$0xff]
    %v155 = vld [vmem:[%s3 + $0x28] sm:$0xff]
    %v156 = vld [vmem:[%s3 + $0x30] sm:$0xff]
    %v157 = vld [vmem:[%s3 + $0x38] sm:$0xff]
    %v158 = vsel %vm134, %v150, 4293918720
    %v159 = vsel %vm135, %v151, 4293918720
    %v160 = vsel %vm136, %v152, 4293918720
    %v161 = vsel %vm137, %v153, 4293918720
    %v162 = vsel %vm138, %v154, 4293918720
    %v163 = vsel %vm139, %v155, 4293918720
    %v164 = vsel %vm140, %v156, 4293918720
    %v165 = vsel %vm141, %v157, 4293918720
    %v166 = vlaneseq
    %v167 = vand.u32 %v166, 127
    %168 = vset.pattern.permute.xlu0 0
    %169 = vperm.xlu0 %168, %v142
    %v170 = vpop.permute.xlu0 %169
    %171 = vset.pattern.permute.xlu0 0
    %172 = vperm.xlu0 %171, %v143
    %v173 = vpop.permute.xlu0 %172
    %174 = vset.pattern.permute.xlu0 0
    %175 = vperm.xlu0 %174, %v144
    %v176 = vpop.permute.xlu0 %175
    %177 = vset.pattern.permute.xlu0 0
    %178 = vperm.xlu0 %177, %v145
    %v179 = vpop.permute.xlu0 %178
    %180 = vset.pattern.permute.xlu0 0
    %181 = vperm.xlu0 %180, %v146
    %v182 = vpop.permute.xlu0 %181
    %183 = vset.pattern.permute.xlu0 0
    %184 = vperm.xlu0 %183, %v147
    %v185 = vpop.permute.xlu0 %184
    %186 = vset.pattern.permute.xlu0 0
    %187 = vperm.xlu0 %186, %v148
    %v188 = vpop.permute.xlu0 %187
    %189 = vset.pattern.permute.xlu0 0
    %190 = vperm.xlu0 %189, %v149
    %v191 = vpop.permute.xlu0 %190
    %vm192 = vcmp.eq.s32.totalorder %v170, %v167
    %vm193 = vcmp.eq.s32.totalorder %v173, %v167
    %vm194 = vcmp.eq.s32.totalorder %v176, %v167
    %vm195 = vcmp.eq.s32.totalorder %v179, %v167
    %vm196 = vcmp.eq.s32.totalorder %v182, %v167
    %vm197 = vcmp.eq.s32.totalorder %v185, %v167
    %vm198 = vcmp.eq.s32.totalorder %v188, %v167
    %vm199 = vcmp.eq.s32.totalorder %v191, %v167
    %v200 = vsub.s32 %v167, 2
    %201 = vset.pattern.permute.xlu0 1
    %202 = vperm.xlu0 %201, %v142
    %v203 = vpop.permute.xlu0 %202
    %204 = vset.pattern.permute.xlu0 1
    %205 = vperm.xlu0 %204, %v143
    %v206 = vpop.permute.xlu0 %205
    %207 = vset.pattern.permute.xlu0 1
    %208 = vperm.xlu0 %207, %v144
    %v209 = vpop.permute.xlu0 %208
    %210 = vset.pattern.permute.xlu0 1
    %211 = vperm.xlu0 %210, %v145
    %v212 = vpop.permute.xlu0 %211
    %213 = vset.pattern.permute.xlu0 1
    %214 = vperm.xlu0 %213, %v146
    %v215 = vpop.permute.xlu0 %214
    %216 = vset.pattern.permute.xlu0 1
    %217 = vperm.xlu0 %216, %v147
    %v218 = vpop.permute.xlu0 %217
    %219 = vset.pattern.permute.xlu0 1
    %220 = vperm.xlu0 %219, %v148
    %v221 = vpop.permute.xlu0 %220
    %222 = vset.pattern.permute.xlu0 1
    %223 = vperm.xlu0 %222, %v149
    %v224 = vpop.permute.xlu0 %223
    %vm225 = vcmp.eq.s32.totalorder %v203, %v200
    %vm226 = vcmp.eq.s32.totalorder %v206, %v200
    %vm227 = vcmp.eq.s32.totalorder %v209, %v200
    %vm228 = vcmp.eq.s32.totalorder %v212, %v200
    %vm229 = vcmp.eq.s32.totalorder %v215, %v200
    %vm230 = vcmp.eq.s32.totalorder %v218, %v200
    %vm231 = vcmp.eq.s32.totalorder %v221, %v200
    %vm232 = vcmp.eq.s32.totalorder %v224, %v200
    %vm233 = vmor %vm192, %vm225
    %vm234 = vmor %vm193, %vm226
    %vm235 = vmor %vm194, %vm227
    %vm236 = vmor %vm195, %vm228
    %vm237 = vmor %vm196, %vm229
    %vm238 = vmor %vm197, %vm230
    %vm239 = vmor %vm198, %vm231
    %vm240 = vmor %vm199, %vm232
    %v241 = vsub.s32 %v167, 4
    %242 = vset.pattern.permute.xlu0 2
    %243 = vperm.xlu0 %242, %v142
    %v244 = vpop.permute.xlu0 %243
    %245 = vset.pattern.permute.xlu0 2
    %246 = vperm.xlu0 %245, %v143
    %v247 = vpop.permute.xlu0 %246
    %248 = vset.pattern.permute.xlu0 2
    %249 = vperm.xlu0 %248, %v144
    %v250 = vpop.permute.xlu0 %249
    %251 = vset.pattern.permute.xlu0 2
    %252 = vperm.xlu0 %251, %v145
    %v253 = vpop.permute.xlu0 %252
    %254 = vset.pattern.permute.xlu0 2
    %255 = vperm.xlu0 %254, %v146
    %v256 = vpop.permute.xlu0 %255
    %257 = vset.pattern.permute.xlu0 2
    %258 = vperm.xlu0 %257, %v147
    %v259 = vpop.permute.xlu0 %258
    %260 = vset.pattern.permute.xlu0 2
    %261 = vperm.xlu0 %260, %v148
    %v262 = vpop.permute.xlu0 %261
    %263 = vset.pattern.permute.xlu0 2
    %264 = vperm.xlu0 %263, %v149
    %v265 = vpop.permute.xlu0 %264
    %vm266 = vcmp.eq.s32.totalorder %v244, %v241
    %vm267 = vcmp.eq.s32.totalorder %v247, %v241
    %vm268 = vcmp.eq.s32.totalorder %v250, %v241
    %vm269 = vcmp.eq.s32.totalorder %v253, %v241
    %vm270 = vcmp.eq.s32.totalorder %v256, %v241
    %vm271 = vcmp.eq.s32.totalorder %v259, %v241
    %vm272 = vcmp.eq.s32.totalorder %v262, %v241
    %vm273 = vcmp.eq.s32.totalorder %v265, %v241
    %vm274 = vmor %vm233, %vm266
    %vm275 = vmor %vm234, %vm267
    %vm276 = vmor %vm235, %vm268
    %vm277 = vmor %vm236, %vm269
    %vm278 = vmor %vm237, %vm270
    %vm279 = vmor %vm238, %vm271
    %vm280 = vmor %vm239, %vm272
    %vm281 = vmor %vm240, %vm273
    %v282 = vsub.s32 %v167, 6
    %283 = vset.pattern.permute.xlu0 3
    %284 = vperm.xlu0 %283, %v142
    %v285 = vpop.permute.xlu0 %284
    %286 = vset.pattern.permute.xlu0 3
    %287 = vperm.xlu0 %286, %v143
    %v288 = vpop.permute.xlu0 %287
    %289 = vset.pattern.permute.xlu0 3
    %290 = vperm.xlu0 %289, %v144
    %v291 = vpop.permute.xlu0 %290
    %292 = vset.pattern.permute.xlu0 3
    %293 = vperm.xlu0 %292, %v145
    %v294 = vpop.permute.xlu0 %293
    %295 = vset.pattern.permute.xlu0 3
    %296 = vperm.xlu0 %295, %v146
    %v297 = vpop.permute.xlu0 %296
    %298 = vset.pattern.permute.xlu0 3
    %299 = vperm.xlu0 %298, %v147
    %v300 = vpop.permute.xlu0 %299
    %301 = vset.pattern.permute.xlu0 3
    %302 = vperm.xlu0 %301, %v148
    %v303 = vpop.permute.xlu0 %302
    %304 = vset.pattern.permute.xlu0 3
    %305 = vperm.xlu0 %304, %v149
    %v306 = vpop.permute.xlu0 %305
    %vm307 = vcmp.eq.s32.totalorder %v285, %v282
    %vm308 = vcmp.eq.s32.totalorder %v288, %v282
    %vm309 = vcmp.eq.s32.totalorder %v291, %v282
    %vm310 = vcmp.eq.s32.totalorder %v294, %v282
    %vm311 = vcmp.eq.s32.totalorder %v297, %v282
    %vm312 = vcmp.eq.s32.totalorder %v300, %v282
    %vm313 = vcmp.eq.s32.totalorder %v303, %v282
    %vm314 = vcmp.eq.s32.totalorder %v306, %v282
    %vm315 = vmor %vm274, %vm307
    %vm316 = vmor %vm275, %vm308
    %vm317 = vmor %vm276, %vm309
    %vm318 = vmor %vm277, %vm310
    %vm319 = vmor %vm278, %vm311
    %vm320 = vmor %vm279, %vm312
    %vm321 = vmor %vm280, %vm313
    %vm322 = vmor %vm281, %vm314
    %v323 = vsub.s32 %v167, 17
    %324 = vset.pattern.permute.xlu0 4
    %325 = vperm.xlu0 %324, %v142
    %v326 = vpop.permute.xlu0 %325
    %327 = vset.pattern.permute.xlu0 4
    %328 = vperm.xlu0 %327, %v143
    %v329 = vpop.permute.xlu0 %328
    %330 = vset.pattern.permute.xlu0 4
    %331 = vperm.xlu0 %330, %v144
    %v332 = vpop.permute.xlu0 %331
    %333 = vset.pattern.permute.xlu0 4
    %334 = vperm.xlu0 %333, %v145
    %v335 = vpop.permute.xlu0 %334
    %336 = vset.pattern.permute.xlu0 4
    %337 = vperm.xlu0 %336, %v146
    %v338 = vpop.permute.xlu0 %337
    %339 = vset.pattern.permute.xlu0 4
    %340 = vperm.xlu0 %339, %v147
    %v341 = vpop.permute.xlu0 %340
    %342 = vset.pattern.permute.xlu0 4
    %343 = vperm.xlu0 %342, %v148
    %v344 = vpop.permute.xlu0 %343
    %345 = vset.pattern.permute.xlu0 4
    %346 = vperm.xlu0 %345, %v149
    %v347 = vpop.permute.xlu0 %346
    %vm348 = vcmp.eq.s32.totalorder %v326, %v323
    %vm349 = vcmp.eq.s32.totalorder %v329, %v323
    %vm350 = vcmp.eq.s32.totalorder %v332, %v323
    %vm351 = vcmp.eq.s32.totalorder %v335, %v323
    %vm352 = vcmp.eq.s32.totalorder %v338, %v323
    %vm353 = vcmp.eq.s32.totalorder %v341, %v323
    %vm354 = vcmp.eq.s32.totalorder %v344, %v323
    %vm355 = vcmp.eq.s32.totalorder %v347, %v323
    %vm356 = vmor %vm315, %vm348
    %vm357 = vmor %vm316, %vm349
    %vm358 = vmor %vm317, %vm350
    %vm359 = vmor %vm318, %vm351
    %vm360 = vmor %vm319, %vm352
    %vm361 = vmor %vm320, %vm353
    %vm362 = vmor %vm321, %vm354
    %vm363 = vmor %vm322, %vm355
    %v364 = vsub.s32 %v167, 51
    %365 = vset.pattern.permute.xlu0 0
    %366 = vperm.xlu0 %365, %v158
    %v367 = vpop.permute.xlu0 %366
    %368 = vset.pattern.permute.xlu0 0
    %369 = vperm.xlu0 %368, %v159
    %v370 = vpop.permute.xlu0 %369
    %371 = vset.pattern.permute.xlu0 0
    %372 = vperm.xlu0 %371, %v160
    %v373 = vpop.permute.xlu0 %372
    %374 = vset.pattern.permute.xlu0 0
    %375 = vperm.xlu0 %374, %v161
    %v376 = vpop.permute.xlu0 %375
    %377 = vset.pattern.permute.xlu0 0
    %378 = vperm.xlu0 %377, %v162
    %v379 = vpop.permute.xlu0 %378
    %380 = vset.pattern.permute.xlu0 0
    %381 = vperm.xlu0 %380, %v163
    %v382 = vpop.permute.xlu0 %381
    %383 = vset.pattern.permute.xlu0 0
    %384 = vperm.xlu0 %383, %v164
    %v385 = vpop.permute.xlu0 %384
    %386 = vset.pattern.permute.xlu0 0
    %387 = vperm.xlu0 %386, %v165
    %v388 = vpop.permute.xlu0 %387
    %vm389 = vcmp.eq.s32.totalorder %v367, %v364
    %vm390 = vcmp.eq.s32.totalorder %v370, %v364
    %vm391 = vcmp.eq.s32.totalorder %v373, %v364
    %vm392 = vcmp.eq.s32.totalorder %v376, %v364
    %vm393 = vcmp.eq.s32.totalorder %v379, %v364
    %vm394 = vcmp.eq.s32.totalorder %v382, %v364
    %vm395 = vcmp.eq.s32.totalorder %v385, %v364
    %vm396 = vcmp.eq.s32.totalorder %v388, %v364
    %vm397 = vmor %vm356, %vm389
    %vm398 = vmor %vm357, %vm390
    %vm399 = vmor %vm358, %vm391
    %vm400 = vmor %vm359, %vm392
    %vm401 = vmor %vm360, %vm393
    %vm402 = vmor %vm361, %vm394
    %vm403 = vmor %vm362, %vm395
    %vm404 = vmor %vm363, %vm396
    %v405 = vsub.s32 %v167, 70
    %406 = vset.pattern.permute.xlu0 1
    %407 = vperm.xlu0 %406, %v158
    %v408 = vpop.permute.xlu0 %407
    %409 = vset.pattern.permute.xlu0 1
    %410 = vperm.xlu0 %409, %v159
    %v411 = vpop.permute.xlu0 %410
    %412 = vset.pattern.permute.xlu0 1
    %413 = vperm.xlu0 %412, %v160
    %v414 = vpop.permute.xlu0 %413
    %415 = vset.pattern.permute.xlu0 1
    %416 = vperm.xlu0 %415, %v161
    %v417 = vpop.permute.xlu0 %416
    %418 = vset.pattern.permute.xlu0 1
    %419 = vperm.xlu0 %418, %v162
    %v420 = vpop.permute.xlu0 %419
    %421 = vset.pattern.permute.xlu0 1
    %422 = vperm.xlu0 %421, %v163
    %v423 = vpop.permute.xlu0 %422
    %424 = vset.pattern.permute.xlu0 1
    %425 = vperm.xlu0 %424, %v164
    %v426 = vpop.permute.xlu0 %425
    %427 = vset.pattern.permute.xlu0 1
    %428 = vperm.xlu0 %427, %v165
    %v429 = vpop.permute.xlu0 %428
    %vm430 = vcmp.eq.s32.totalorder %v408, %v405
    %vm431 = vcmp.eq.s32.totalorder %v411, %v405
    %vm432 = vcmp.eq.s32.totalorder %v414, %v405
    %vm433 = vcmp.eq.s32.totalorder %v417, %v405
    %vm434 = vcmp.eq.s32.totalorder %v420, %v405
    %vm435 = vcmp.eq.s32.totalorder %v423, %v405
    %vm436 = vcmp.eq.s32.totalorder %v426, %v405
    %vm437 = vcmp.eq.s32.totalorder %v429, %v405
    %vm438 = vmor %vm397, %vm430
    %vm439 = vmor %vm398, %vm431
    %vm440 = vmor %vm399, %vm432
    %vm441 = vmor %vm400, %vm433
    %vm442 = vmor %vm401, %vm434
    %vm443 = vmor %vm402, %vm435
    %vm444 = vmor %vm403, %vm436
    %vm445 = vmor %vm404, %vm437
    %v446 = vld [vmem:[#allocation2] sm:$0xff]
    %v447 = vsel %vm438, 1, 0
    %v448 = vsel %vm439, 1, 0
    %v449 = vsel %vm440, 1, 0
    %v450 = vsel %vm441, 1, 0
    %v451 = vsel %vm442, 1, 0
    %v452 = vsel %vm443, 1, 0
    %v453 = vsel %vm444, 1, 0
    %v454 = vsel %vm445, 1, 0
    %v455 = vcvt.s32.f32 %v447
    %v456 = vcvt.s32.f32 %v448
    %v457 = vcvt.s32.f32 %v449
    %v458 = vcvt.s32.f32 %v450
    %v459 = vcvt.s32.f32 %v451
    %v460 = vcvt.s32.f32 %v452
    %v461 = vcvt.s32.f32 %v453
    %v462 = vcvt.s32.f32 %v454
    %v463 = vrot.slane %v455, 4
    %v464 = vadd.f32 %v455, %v463
    %v465 = vrot.slane %v464, 2
    %v466 = vadd.f32 %v464, %v465
    %v467 = vrot.slane %v466, 1
    %v468 = vadd.f32 %v466, %v467
    %v469 = vrot.slane %v456, 4
    %v470 = vadd.f32 %v456, %v469
    %v471 = vrot.slane %v470, 2
    %v472 = vadd.f32 %v470, %v471
    %v473 = vrot.slane %v472, 1
    %v474 = vadd.f32 %v472, %v473
    %v475 = vrot.slane %v457, 4
    %v476 = vadd.f32 %v457, %v475
    %v477 = vrot.slane %v476, 2
    %v478 = vadd.f32 %v476, %v477
    %v479 = vrot.slane %v478, 1
    %v480 = vadd.f32 %v478, %v479
    %v481 = vrot.slane %v458, 4
    %v482 = vadd.f32 %v458, %v481
    %v483 = vrot.slane %v482, 2
    %v484 = vadd.f32 %v482, %v483
    %v485 = vrot.slane %v484, 1
    %v486 = vadd.f32 %v484, %v485
    %v487 = vrot.slane %v459, 4
    %v488 = vadd.f32 %v459, %v487
    %v489 = vrot.slane %v488, 2
    %v490 = vadd.f32 %v488, %v489
    %v491 = vrot.slane %v490, 1
    %v492 = vadd.f32 %v490, %v491
    %v493 = vrot.slane %v460, 4
    %v494 = vadd.f32 %v460, %v493
    %v495 = vrot.slane %v494, 2
    %v496 = vadd.f32 %v494, %v495
    %v497 = vrot.slane %v496, 1
    %v498 = vadd.f32 %v496, %v497
    %v499 = vrot.slane %v461, 4
    %v500 = vadd.f32 %v461, %v499
    %v501 = vrot.slane %v500, 2
    %v502 = vadd.f32 %v500, %v501
    %v503 = vrot.slane %v502, 1
    %v504 = vadd.f32 %v502, %v503
    %v505 = vrot.slane %v462, 4
    %v506 = vadd.f32 %v462, %v505
    %v507 = vrot.slane %v506, 2
    %v508 = vadd.f32 %v506, %v507
    %v509 = vrot.slane %v508, 1
    %v510 = vadd.f32 %v508, %v509
    %vm519 = vcmask 1041409
    %v520 = vsel %vm519, %v474, %v468
    %vm521 = vcmask 1042434
    %v522 = vsel %vm521, %v480, %v520
    %vm523 = vcmask 1043459
    %v524 = vsel %vm523, %v486, %v522
    %vm525 = vcmask 1044484
    %v526 = vsel %vm525, %v492, %v524
    %vm527 = vcmask 1045509
    %v528 = vsel %vm527, %v498, %v526
    %vm529 = vcmask 1046534
    %v530 = vsel %vm529, %v504, %v528
    %vm531 = vcmask 1047559
    %v532 = vsel %vm531, %v510, %v530
    %v534 = vadd.f32 %v446, %v532
    %535 = vst [vmem:[#allocation2] sm:$0xff] %v534
    %v536 = vcvt.s32.f32 %v102
    %v537 = vcvt.s32.f32 %v103
    %v538 = vcvt.s32.f32 %v104
    %v539 = vcvt.s32.f32 %v105
    %v540 = vcvt.s32.f32 %v106
    %v541 = vcvt.s32.f32 %v107
    %v542 = vcvt.s32.f32 %v108
    %v543 = vcvt.s32.f32 %v109
    %v544 = vld [vmem:[%s0] sm:$0xff]
    %v545 = vld [vmem:[%s0 + $0x8] sm:$0xff]
    %v546 = vld [vmem:[%s0 + $0x10] sm:$0xff]
    %v547 = vld [vmem:[%s0 + $0x18] sm:$0xff]
    %v548 = vld [vmem:[%s0 + $0x20] sm:$0xff]
    %v549 = vld [vmem:[%s0 + $0x28] sm:$0xff]
    %v550 = vld [vmem:[%s0 + $0x30] sm:$0xff]
    %v551 = vld [vmem:[%s0 + $0x38] sm:$0xff]
    %v552 = vld [vmem:[%s5] sm:$0x7]
    %v553 = vld [vmem:[%s6] sm:$0x1]
    %v555 = vperm.slane %v553, 0
    %vm557 = vcmask 23552
    %v559 = vsel %vm557, %v544, 0
    %v562 = vsel %vm557, %v545, 0
    %v565 = vsel %vm557, %v546, 0
    %v568 = vsel %vm557, %v547, 0
    %v571 = vsel %vm557, %v548, 0
    %v574 = vsel %vm557, %v549, 0
    %v577 = vsel %vm557, %v550, 0
    %v580 = vsel %vm557, %v551, 0
    %vm582 = vcmask 1042432
    %v584 = vsel %vm582, %v552, 0
    %586 = vmatpush.msra.mxu0 0.0
    %587 = vmatpush.msra.mxu0 0.0
    %588 = vmatpush.msra.mxu0 0.0
    %589 = vmatpush.msra.mxu0 0.0
    %590 = vmatpush.msra.mxu0 0.0
    %591 = vmatpush.msra.mxu0 0.0
    %592 = vmatpush.msra.mxu0 0.0
    %593 = vmatpush.msra.mxu0 0.0
    %594 = vmatpush.msra.mxu0 0.0
    %595 = vmatpush.msra.mxu0 0.0
    %596 = vmatpush.msra.mxu0 0.0
    %597 = vmatpush.msra.mxu0 0.0
    %598 = vmatpush.msra.mxu0 0.0
    %599 = vmatpush.msra.mxu0 0.0
    %600 = vmatpush.msra.mxu0 0.0
    %601 = vmatpush.msra.mxu0 %v584
    %602 = vmatmul.f32.gmra.mxu0 %v559
    %v603 = vpop.f32.mrf.mxu0
    %v604 = vadd.f32 %v555, %v603
    %605 = vmatmul.f32.gmra.mxu0 %v562
    %v606 = vpop.f32.mrf.mxu0
    %v607 = vadd.f32 %v555, %v606
    %608 = vmatmul.f32.gmra.mxu0 %v565
    %v609 = vpop.f32.mrf.mxu0
    %v610 = vadd.f32 %v555, %v609
    %611 = vmatmul.f32.gmra.mxu0 %v568
    %v612 = vpop.f32.mrf.mxu0
    %v613 = vadd.f32 %v555, %v612
    %614 = vmatmul.f32.gmra.mxu0 %v571
    %v615 = vpop.f32.mrf.mxu0
    %v616 = vadd.f32 %v555, %v615
    %617 = vmatmul.f32.gmra.mxu0 %v574
    %v618 = vpop.f32.mrf.mxu0
    %v619 = vadd.f32 %v555, %v618
    %620 = vmatmul.f32.gmra.mxu0 %v577
    %v621 = vpop.f32.mrf.mxu0
    %v622 = vadd.f32 %v555, %v621
    %623 = vmatmul.f32.gmra.mxu0 %v580
    %v624 = vpop.f32.mrf.mxu0
    %v625 = vadd.f32 %v555, %v624
    %626 = vdwg.mxu0
    %v627 = vmax.f32 %v604, 0.0
    %v628 = vmax.f32 %v607, 0.0
    %v629 = vmax.f32 %v610, 0.0
    %v630 = vmax.f32 %v613, 0.0
    %v631 = vmax.f32 %v616, 0.0
    %v632 = vmax.f32 %v619, 0.0
    %v633 = vmax.f32 %v622, 0.0
    %v634 = vmax.f32 %v625, 0.0
    %v635 = vld [vmem:[%s1] sm:$0xff]
    %v636 = vld [vmem:[%s1 + $0x8] sm:$0xff]
    %v637 = vld [vmem:[%s1 + $0x10] sm:$0xff]
    %v638 = vld [vmem:[%s1 + $0x18] sm:$0xff]
    %v639 = vld [vmem:[%s1 + $0x20] sm:$0xff]
    %v640 = vld [vmem:[%s1 + $0x28] sm:$0xff]
    %v641 = vld [vmem:[%s1 + $0x30] sm:$0xff]
    %v642 = vld [vmem:[%s1 + $0x38] sm:$0xff]
    %v643 = vld [vmem:[%s7] sm:$0x3]
    %v644 = vld [vmem:[%s8] sm:$0x1]
    %v646 = vperm.slane %v644, 0
    %vm648 = vcmask 15360
    %v650 = vsel %vm648, %v635, 0
    %v653 = vsel %vm648, %v636, 0
    %v656 = vsel %vm648, %v637, 0
    %v659 = vsel %vm648, %v638, 0
    %v662 = vsel %vm648, %v639, 0
    %v665 = vsel %vm648, %v640, 0
    %v668 = vsel %vm648, %v641, 0
    %v671 = vsel %vm648, %v642, 0
    %vm673 = vcmask 1041408
    %v675 = vsel %vm673, %v643, 0
    %677 = vmatpush.msra.mxu0 0.0
    %678 = vmatpush.msra.mxu0 0.0
    %679 = vmatpush.msra.mxu0 0.0
    %680 = vmatpush.msra.mxu0 0.0
    %681 = vmatpush.msra.mxu0 0.0
    %682 = vmatpush.msra.mxu0 0.0
    %683 = vmatpush.msra.mxu0 0.0
    %684 = vmatpush.msra.mxu0 0.0
    %685 = vmatpush.msra.mxu0 0.0
    %686 = vmatpush.msra.mxu0 0.0
    %687 = vmatpush.msra.mxu0 0.0
    %688 = vmatpush.msra.mxu0 0.0
    %689 = vmatpush.msra.mxu0 0.0
    %690 = vmatpush.msra.mxu0 0.0
    %691 = vmatpush.msra.mxu0 0.0
    %692 = vmatpush.msra.mxu0 %v675
    %693 = vmatmul.f32.gmra.mxu0 %v650
    %v694 = vpop.f32.mrf.mxu0
    %v695 = vadd.f32 %v646, %v694
    %696 = vmatmul.f32.gmra.mxu0 %v653
    %v697 = vpop.f32.mrf.mxu0
    %v698 = vadd.f32 %v646, %v697
    %699 = vmatmul.f32.gmra.mxu0 %v656
    %v700 = vpop.f32.mrf.mxu0
    %v701 = vadd.f32 %v646, %v700
    %702 = vmatmul.f32.gmra.mxu0 %v659
    %v703 = vpop.f32.mrf.mxu0
    %v704 = vadd.f32 %v646, %v703
    %705 = vmatmul.f32.gmra.mxu0 %v662
    %v706 = vpop.f32.mrf.mxu0
    %v707 = vadd.f32 %v646, %v706
    %708 = vmatmul.f32.gmra.mxu0 %v665
    %v709 = vpop.f32.mrf.mxu0
    %v710 = vadd.f32 %v646, %v709
    %711 = vmatmul.f32.gmra.mxu0 %v668
    %v712 = vpop.f32.mrf.mxu0
    %v713 = vadd.f32 %v646, %v712
    %714 = vmatmul.f32.gmra.mxu0 %v671
    %v715 = vpop.f32.mrf.mxu0
    %v716 = vadd.f32 %v646, %v715
    %717 = vdwg.mxu0
    %v718 = vmax.f32 %v695, 0.0
    %v719 = vmax.f32 %v698, 0.0
    %v720 = vmax.f32 %v701, 0.0
    %v721 = vmax.f32 %v704, 0.0
    %v722 = vmax.f32 %v707, 0.0
    %v723 = vmax.f32 %v710, 0.0
    %v724 = vmax.f32 %v713, 0.0
    %v725 = vmax.f32 %v716, 0.0
    %v726 = vld [vmem:[#allocation3] sm:$0xff]
    %728 = vset.pattern.permute.xlu0 0
    %729 = vperm.xlu0 %728, %v536
    %v730 = vpop.permute.xlu0 %729
    %733 = vset.pattern.permute.xlu0 0
    %734 = vperm.xlu0 %733, %v537
    %v735 = vpop.permute.xlu0 %734
    %738 = vset.pattern.permute.xlu0 0
    %739 = vperm.xlu0 %738, %v538
    %v740 = vpop.permute.xlu0 %739
    %743 = vset.pattern.permute.xlu0 0
    %744 = vperm.xlu0 %743, %v539
    %v745 = vpop.permute.xlu0 %744
    %748 = vset.pattern.permute.xlu0 0
    %749 = vperm.xlu0 %748, %v540
    %v750 = vpop.permute.xlu0 %749
    %753 = vset.pattern.permute.xlu0 0
    %754 = vperm.xlu0 %753, %v541
    %v755 = vpop.permute.xlu0 %754
    %758 = vset.pattern.permute.xlu0 0
    %759 = vperm.xlu0 %758, %v542
    %v760 = vpop.permute.xlu0 %759
    %763 = vset.pattern.permute.xlu0 0
    %764 = vperm.xlu0 %763, %v543
    %v765 = vpop.permute.xlu0 %764
    %v767 = vmul.f32 %v627, %v730
    %v768 = vmul.f32 %v628, %v735
    %v769 = vmul.f32 %v629, %v740
    %v770 = vmul.f32 %v630, %v745
    %v771 = vmul.f32 %v631, %v750
    %v772 = vmul.f32 %v632, %v755
    %v773 = vmul.f32 %v633, %v760
    %v774 = vmul.f32 %v634, %v765
    %vm775 = vcmask 261120
    %v776 = vsel %vm775, %v767, 0.0
    %v777 = vrot.slane %v776, 4
    %v778 = vadd.f32 %v776, %v777
    %v779 = vrot.slane %v778, 2
    %v780 = vadd.f32 %v778, %v779
    %v781 = vrot.slane %v780, 1
    %v782 = vadd.f32 %v780, %v781
    %v783 = vsel %vm775, %v768, 0.0
    %v784 = vrot.slane %v783, 4
    %v785 = vadd.f32 %v783, %v784
    %v786 = vrot.slane %v785, 2
    %v787 = vadd.f32 %v785, %v786
    %v788 = vrot.slane %v787, 1
    %v789 = vadd.f32 %v787, %v788
    %v790 = vsel %vm775, %v769, 0.0
    %v791 = vrot.slane %v790, 4
    %v792 = vadd.f32 %v790, %v791
    %v793 = vrot.slane %v792, 2
    %v794 = vadd.f32 %v792, %v793
    %v795 = vrot.slane %v794, 1
    %v796 = vadd.f32 %v794, %v795
    %v797 = vsel %vm775, %v770, 0.0
    %v798 = vrot.slane %v797, 4
    %v799 = vadd.f32 %v797, %v798
    %v800 = vrot.slane %v799, 2
    %v801 = vadd.f32 %v799, %v800
    %v802 = vrot.slane %v801, 1
    %v803 = vadd.f32 %v801, %v802
    %v804 = vsel %vm775, %v771, 0.0
    %v805 = vrot.slane %v804, 4
    %v806 = vadd.f32 %v804, %v805
    %v807 = vrot.slane %v806, 2
    %v808 = vadd.f32 %v806, %v807
    %v809 = vrot.slane %v808, 1
    %v810 = vadd.f32 %v808, %v809
    %v811 = vsel %vm775, %v772, 0.0
    %v812 = vrot.slane %v811, 4
    %v813 = vadd.f32 %v811, %v812
    %v814 = vrot.slane %v813, 2
    %v815 = vadd.f32 %v813, %v814
    %v816 = vrot.slane %v815, 1
    %v817 = vadd.f32 %v815, %v816
    %v818 = vsel %vm775, %v773, 0.0
    %v819 = vrot.slane %v818, 4
    %v820 = vadd.f32 %v818, %v819
    %v821 = vrot.slane %v820, 2
    %v822 = vadd.f32 %v820, %v821
    %v823 = vrot.slane %v822, 1
    %v824 = vadd.f32 %v822, %v823
    %v825 = vsel %vm775, %v774, 0.0
    %v826 = vrot.slane %v825, 4
    %v827 = vadd.f32 %v825, %v826
    %v828 = vrot.slane %v827, 2
    %v829 = vadd.f32 %v827, %v828
    %v830 = vrot.slane %v829, 1
    %v831 = vadd.f32 %v829, %v830
    %v840 = vsel %vm519, %v789, %v782
    %v841 = vsel %vm521, %v796, %v840
    %v842 = vsel %vm523, %v803, %v841
    %v843 = vsel %vm525, %v810, %v842
    %v844 = vsel %vm527, %v817, %v843
    %v845 = vsel %vm529, %v824, %v844
    %v846 = vsel %vm531, %v831, %v845
    %v848 = vadd.f32 %v726, %v846
    %849 = vst.msk [vmem:[#allocation3] sm:$0xff] %vm775, %v848
    %v850 = vld [vmem:[#allocation4] sm:$0xff]
    %v851 = vmul.f32 %v718, %v730
    %v852 = vmul.f32 %v719, %v735
    %v853 = vmul.f32 %v720, %v740
    %v854 = vmul.f32 %v721, %v745
    %v855 = vmul.f32 %v722, %v750
    %v856 = vmul.f32 %v723, %v755
    %v857 = vmul.f32 %v724, %v760
    %v858 = vmul.f32 %v725, %v765
    %v859 = vsel %vm775, %v851, 0.0
    %v860 = vrot.slane %v859, 4
    %v861 = vadd.f32 %v859, %v860
    %v862 = vrot.slane %v861, 2
    %v863 = vadd.f32 %v861, %v862
    %v864 = vrot.slane %v863, 1
    %v865 = vadd.f32 %v863, %v864
    %v866 = vsel %vm775, %v852, 0.0
    %v867 = vrot.slane %v866, 4
    %v868 = vadd.f32 %v866, %v867
    %v869 = vrot.slane %v868, 2
    %v870 = vadd.f32 %v868, %v869
    %v871 = vrot.slane %v870, 1
    %v872 = vadd.f32 %v870, %v871
    %v873 = vsel %vm775, %v853, 0.0
    %v874 = vrot.slane %v873, 4
    %v875 = vadd.f32 %v873, %v874
    %v876 = vrot.slane %v875, 2
    %v877 = vadd.f32 %v875, %v876
    %v878 = vrot.slane %v877, 1
    %v879 = vadd.f32 %v877, %v878
    %v880 = vsel %vm775, %v854, 0.0
    %v881 = vrot.slane %v880, 4
    %v882 = vadd.f32 %v880, %v881
    %v883 = vrot.slane %v882, 2
    %v884 = vadd.f32 %v882, %v883
    %v885 = vrot.slane %v884, 1
    %v886 = vadd.f32 %v884, %v885
    %v887 = vsel %vm775, %v855, 0.0
    %v888 = vrot.slane %v887, 4
    %v889 = vadd.f32 %v887, %v888
    %v890 = vrot.slane %v889, 2
    %v891 = vadd.f32 %v889, %v890
    %v892 = vrot.slane %v891, 1
    %v893 = vadd.f32 %v891, %v892
    %v894 = vsel %vm775, %v856, 0.0
    %v895 = vrot.slane %v894, 4
    %v896 = vadd.f32 %v894, %v895
    %v897 = vrot.slane %v896, 2
    %v898 = vadd.f32 %v896, %v897
    %v899 = vrot.slane %v898, 1
    %v900 = vadd.f32 %v898, %v899
    %v901 = vsel %vm775, %v857, 0.0
    %v902 = vrot.slane %v901, 4
    %v903 = vadd.f32 %v901, %v902
    %v904 = vrot.slane %v903, 2
    %v905 = vadd.f32 %v903, %v904
    %v906 = vrot.slane %v905, 1
    %v907 = vadd.f32 %v905, %v906
    %v908 = vsel %vm775, %v858, 0.0
    %v909 = vrot.slane %v908, 4
    %v910 = vadd.f32 %v908, %v909
    %v911 = vrot.slane %v910, 2
    %v912 = vadd.f32 %v910, %v911
    %v913 = vrot.slane %v912, 1
    %v914 = vadd.f32 %v912, %v913
    %v923 = vsel %vm519, %v872, %v865
    %v924 = vsel %vm521, %v879, %v923
    %v925 = vsel %vm523, %v886, %v924
    %v926 = vsel %vm525, %v893, %v925
    %v927 = vsel %vm527, %v900, %v926
    %v928 = vsel %vm529, %v907, %v927
    %v929 = vsel %vm531, %v914, %v928
    %v931 = vadd.f32 %v850, %v929
    %932 = vst.msk [vmem:[#allocation4] sm:$0xff] %vm775, %v931
    // Predicated region
    $region74: #{tpu_custom_call.1} parent=1 // pred_check
      %p933 = pneg %p57
    $region75: #{tpu_custom_call.1} parent=1 // pred_check_branch
      %935 = sbr.rel (%p933) target = $region77
    $region76: #{tpu_custom_call.1} parent=1 // pred_region
      %vm936 = vcmp.gt.s32.totalorder %v65, 1
      %v937 = vsel %vm936, %v65, 1
      %v938 = vcvt.s32.f32 %v937
      %v939 = vrcp.pop %v938
      %v940 = vld [vmem:[#allocation2] sm:$0xff]
      %942 = vset.pattern.permute.xlu0 0
      %943 = vperm.xlu0 %942, %v939
      %v944 = vpop.permute.xlu0 %943
      %v946 = vmul.f32 %v940, %v944
      %v947 = vld [vmem:[%s9] sm:$0xff]
      %v948 = vld [vmem:[%s9 + $0x8] sm:$0xff]
      %v949 = vld [vmem:[%s9 + $0x10] sm:$0xff]
      %v950 = vld [vmem:[%s9 + $0x18] sm:$0xff]
      %v951 = vld [vmem:[%s9 + $0x20] sm:$0xff]
      %v952 = vld [vmem:[%s9 + $0x28] sm:$0xff]
      %v953 = vld [vmem:[%s9 + $0x30] sm:$0xff]
      %v954 = vld [vmem:[%s9 + $0x38] sm:$0xff]
      %v955 = vld [vmem:[%s9 + $0x40] sm:$0xff]
      %v956 = vld [vmem:[%s9 + $0x48] sm:$0xff]
      %v957 = vld [vmem:[%s9 + $0x50] sm:$0xff]
      %v958 = vld [vmem:[%s9 + $0x58] sm:$0xff]
      %v959 = vld [vmem:[%s9 + $0x60] sm:$0xff]
      %v960 = vld [vmem:[%s9 + $0x68] sm:$0xff]
      %v961 = vld [vmem:[%s9 + $0x70] sm:$0xff]
      %v962 = vld [vmem:[%s9 + $0x78] sm:$0xff]
      %v963 = vld [vmem:[#allocation3] sm:$0xff]
      %v964 = vmul.f32 %v963, %v944
      %v965 = vld [vmem:[%s10] sm:$0xff]
      %v966 = vld [vmem:[%s10 + $0x8] sm:$0xff]
      %v967 = vld [vmem:[%s10 + $0x10] sm:$0xff]
      %v968 = vld [vmem:[%s10 + $0x18] sm:$0xff]
      %v970 = vsel %vm775, %v964, 0
      %972 = vmatpush.msra.mxu0 0.0
      %973 = vmatpush.msra.mxu0 0.0
      %974 = vmatpush.msra.mxu0 0.0
      %975 = vmatpush.msra.mxu0 0.0
      %976 = vmatpush.msra.mxu0 0.0
      %977 = vmatpush.msra.mxu0 0.0
      %978 = vmatpush.msra.mxu0 0.0
      %979 = vmatpush.msra.mxu0 0.0
      %980 = vmatpush.msra.mxu0 0.0
      %981 = vmatpush.msra.mxu0 0.0
      %982 = vmatpush.msra.mxu0 0.0
      %983 = vmatpush.msra.mxu0 0.0
      %984 = vmatpush.msra.mxu0 %v968
      %985 = vmatpush.msra.mxu0 %v967
      %986 = vmatpush.msra.mxu0 %v966
      %987 = vmatpush.msra.mxu0 %v965
      %988 = vmatmul.f32.gmra.mxu0 %v970
      %v989 = vpop.f32.mrf.mxu0
      %v990 = vadd.f32 0.0, %v989
      %991 = vdwg.mxu0
      %992 = vmatpush.msra.mxu0 %v962
      %993 = vmatpush.msra.mxu0 %v961
      %994 = vmatpush.msra.mxu0 %v960
      %995 = vmatpush.msra.mxu0 %v959
      %996 = vmatpush.msra.mxu0 %v958
      %997 = vmatpush.msra.mxu0 %v957
      %998 = vmatpush.msra.mxu0 %v956
      %999 = vmatpush.msra.mxu0 %v955
      %1000 = vmatpush.msra.mxu0 %v954
      %1001 = vmatpush.msra.mxu0 %v953
      %1002 = vmatpush.msra.mxu0 %v952
      %1003 = vmatpush.msra.mxu0 %v951
      %1004 = vmatpush.msra.mxu0 %v950
      %1005 = vmatpush.msra.mxu0 %v949
      %1006 = vmatpush.msra.mxu0 %v948
      %1007 = vmatpush.msra.mxu0 %v947
      %1008 = vmatmul.f32.gmra.mxu0 %v946
      %v1009 = vpop.f32.mrf.mxu0
      %v1010 = vadd.f32 %v990, %v1009
      %1011 = vdwg.mxu0
      %v1012 = vld [vmem:[#allocation4] sm:$0xff]
      %v1013 = vmul.f32 %v1012, %v944
      %v1014 = vld [vmem:[%s11] sm:$0xff]
      %v1015 = vld [vmem:[%s11 + $0x8] sm:$0xff]
      %v1016 = vld [vmem:[%s11 + $0x10] sm:$0xff]
      %v1017 = vld [vmem:[%s11 + $0x18] sm:$0xff]
      %v1019 = vsel %vm775, %v1013, 0
      %1021 = vmatpush.msra.mxu0 0.0
      %1022 = vmatpush.msra.mxu0 0.0
      %1023 = vmatpush.msra.mxu0 0.0
      %1024 = vmatpush.msra.mxu0 0.0
      %1025 = vmatpush.msra.mxu0 0.0
      %1026 = vmatpush.msra.mxu0 0.0
      %1027 = vmatpush.msra.mxu0 0.0
      %1028 = vmatpush.msra.mxu0 0.0
      %1029 = vmatpush.msra.mxu0 0.0
      %1030 = vmatpush.msra.mxu0 0.0
      %1031 = vmatpush.msra.mxu0 0.0
      %1032 = vmatpush.msra.mxu0 0.0
      %1033 = vmatpush.msra.mxu0 %v1017
      %1034 = vmatpush.msra.mxu0 %v1016
      %1035 = vmatpush.msra.mxu0 %v1015
      %1036 = vmatpush.msra.mxu0 %v1014
      %1037 = vmatmul.f32.gmra.mxu0 %v1019
      %v1038 = vpop.f32.mrf.mxu0
      %v1039 = vadd.f32 0.0, %v1038
      %1040 = vdwg.mxu0
      %v1041 = vadd.f32 %v1010, %v1039
      %v1042 = vld [vmem:[%s12] sm:$0x1]
      %v1044 = vperm.slane %v1042, 0
      %v1046 = vadd.f32 %v1041, %v1044
      %v1047 = vmax.f32 %v1046, 0.0
      %v1048 = vld [vmem:[%s13] sm:$0xff]
      %v1049 = vld [vmem:[%s13 + $0x8] sm:$0xff]
      %v1050 = vld [vmem:[%s13 + $0x10] sm:$0xff]
      %v1051 = vld [vmem:[%s13 + $0x18] sm:$0xff]
      %v1052 = vld [vmem:[%s13 + $0x20] sm:$0xff]
      %v1053 = vld [vmem:[%s13 + $0x28] sm:$0xff]
      %v1054 = vld [vmem:[%s13 + $0x30] sm:$0xff]
      %v1055 = vld [vmem:[%s13 + $0x38] sm:$0xff]
      %v1056 = vld [vmem:[%s14] sm:$0x1]
      %v1058 = vperm.slane %v1056, 0
      %vm1060 = vcmask 523264
      %v1062 = vsel %vm1060, %v1047, 0
      %1064 = vmatpush.msra.mxu0 0.0
      %1065 = vmatpush.msra.mxu0 0.0
      %1066 = vmatpush.msra.mxu0 0.0
      %1067 = vmatpush.msra.mxu0 0.0
      %1068 = vmatpush.msra.mxu0 0.0
      %1069 = vmatpush.msra.mxu0 0.0
      %1070 = vmatpush.msra.mxu0 0.0
      %1071 = vmatpush.msra.mxu0 0.0
      %1072 = vmatpush.msra.mxu0 %v1055
      %1073 = vmatpush.msra.mxu0 %v1054
      %1074 = vmatpush.msra.mxu0 %v1053
      %1075 = vmatpush.msra.mxu0 %v1052
      %1076 = vmatpush.msra.mxu0 %v1051
      %1077 = vmatpush.msra.mxu0 %v1050
      %1078 = vmatpush.msra.mxu0 %v1049
      %1079 = vmatpush.msra.mxu0 %v1048
      %1080 = vmatmul.f32.gmra.mxu0 %v1062
      %v1081 = vpop.f32.mrf.mxu0
      %v1082 = vadd.f32 %v1058, %v1081
      %1083 = vdwg.mxu0
      %v1084 = vmax.f32 %v1082, 0.0
      %v1085 = vld [vmem:[%s15] sm:$0xff]
      %v1086 = vld [vmem:[%s15 + $0x8] sm:$0xff]
      %v1087 = vld [vmem:[%s15 + $0x10] sm:$0xff]
      %v1088 = vld [vmem:[%s15 + $0x18] sm:$0xff]
      %v1089 = vld [vmem:[%s15 + $0x20] sm:$0xff]
      %v1090 = vld [vmem:[%s15 + $0x28] sm:$0xff]
      %v1091 = vld [vmem:[%s15 + $0x30] sm:$0xff]
      %v1092 = vld [vmem:[%s15 + $0x38] sm:$0xff]
      %v1093 = vld [vmem:[%s16] sm:$0x1]
      %v1095 = vperm.slane %v1093, 0
      %v1098 = vsel %vm1060, %v1084, 0
      %1100 = vmatpush.msra.mxu0 0.0
      %1101 = vmatpush.msra.mxu0 0.0
      %1102 = vmatpush.msra.mxu0 0.0
      %1103 = vmatpush.msra.mxu0 0.0
      %1104 = vmatpush.msra.mxu0 0.0
      %1105 = vmatpush.msra.mxu0 0.0
      %1106 = vmatpush.msra.mxu0 0.0
      %1107 = vmatpush.msra.mxu0 0.0
      %1108 = vmatpush.msra.mxu0 %v1092
      %1109 = vmatpush.msra.mxu0 %v1091
      %1110 = vmatpush.msra.mxu0 %v1090
      %1111 = vmatpush.msra.mxu0 %v1089
      %1112 = vmatpush.msra.mxu0 %v1088
      %1113 = vmatpush.msra.mxu0 %v1087
      %1114 = vmatpush.msra.mxu0 %v1086
      %1115 = vmatpush.msra.mxu0 %v1085
      %1116 = vmatmul.f32.gmra.mxu0 %v1098
      %v1117 = vpop.f32.mrf.mxu0
      %v1118 = vadd.f32 %v1095, %v1117
      %1119 = vdwg.mxu0
      %1120 = vst [vmem:[#allocation5] sm:$0xff] %v1118
    $region77: #{tpu_custom_call.1} parent=1 // pred_fallthru
      _
    // Predicated region
    $region78: #{tpu_custom_call.1} parent=1 // pred_check
      _
    $region79: #{tpu_custom_call.1} parent=1 // pred_check_branch
      %1122 = sbr.rel (0) target = $region81
    $region80: #{tpu_custom_call.1} parent=1 // pred_region
      %1124 = vsyncadd [#allocation6], 0
      %s1126 = sshll.u32 [#allocation5], 4
      %s1127 = int_to_ptr.vmem [resolvable:$true] %s1126
      %s1128 = sshll.u32 %s17, 4
      %s1129 = int_to_ptr.hbm [resolvable:$true] %s1128
      %1131 = dma.vmem_to_hbm [thread:$0]  %s1127, 128, %s1129, [#allocation6]
    $region81: #{tpu_custom_call.1} parent=1 // pred_fallthru
      _
    // Predicated region
    $region82: #{tpu_custom_call.1} parent=1 // pred_check
      _
    $region83: #{tpu_custom_call.1} parent=1 // pred_check_branch
      %1133 = sbr.rel (0) target = $region85
    $region84: #{tpu_custom_call.1} parent=1 // pred_region
      %1135 = dma.done [#allocation6], 128
    $region85: #{tpu_custom_call.1} parent=1 // pred_fallthru
      _
    %1136 = vsyncpa [#allocation6], 1

</llo_original>
